<compile_context>
chip_gen: v5e
topology: v5e:2x2
jax: 0.10.0
libtpu: 0.0.40
codegen_flags: <defaults>
</compile_context>

<pallas_src>
import dataclasses
import functools

import jax
import jax.numpy as jnp
from jax.experimental import pallas as pl
from jax.experimental.pallas import tpu as pltpu


# ----------------------------------------------------------------------------------
# In-kernel helpers (pure jnp, traced inside kernels)
# ----------------------------------------------------------------------------------

def _stage_padded(pad_ref, x_hwc, c0=0):
    """Store an (H, W, C) value into the zero-bordered bf16 VMEM scratch at channel offset c0."""
    h, w, c = x_hwc.shape
    pad_ref[1:h + 1, 1:w + 1, c0:c0 + c] = x_hwc.astype(pad_ref.dtype)


def _im2col(pad_ref, h, w, cin):
    """Build the (HW, 9*Cin) im2col LHS (bf16) from the pre-staged padded activation."""
    cols = []
    for k in range(9):
        dy, dx = k // 3, k % 3
        cols.append(pad_ref[dy:dy + h, dx:dx + w, 0:cin])
    return jnp.concatenate(cols, axis=-1).reshape(h * w, 9 * cin)


def _conv3x3_staged(pad_ref, h, w, cin, w_col, b):
    """3x3/pad-1 conv as ONE MXU matmul over the im2col LHS; f32 accumulator + bias."""
    return jnp.dot(_im2col(pad_ref, h, w, cin), w_col,
                   preferred_element_type=jnp.float32) + b


def _conv3x3(pad_ref, x_hwc, w_col, b):
    h, w, cin = x_hwc.shape
    _stage_padded(pad_ref, x_hwc, 0)
    return _conv3x3_staged(pad_ref, h, w, cin, w_col, b)


# ----------------------------------------------------------------------------------
# Pallas kernels
# ----------------------------------------------------------------------------------

def _fnet_kernel(x_ref, w_ref, b_ref, o_ref, pad_ref):
    # TODO(synk): BasicEncoder (instance-norm residual encoder) is external; stand-in =
    # space-to-depth (wrapper) + fused 2*(x/255)-1 normalisation + one 3x3 conv to 256 channels.
    h, w = x_ref.shape[1], x_ref.shape[2]

    @pl.when(pl.program_id(0) == 0)
    def _():
        pad_ref[...] = jnp.zeros_like(pad_ref)   # zero once; borders never rewritten

    x = 2.0 * (x_ref[0] * (1.0 / 255.0)) - 1.0
    out = _conv3x3(pad_ref, x, w_ref[...], b_ref[...])
    o_ref[0] = out.reshape(h, w, -1).astype(o_ref.dtype)


def _context0_kernel(rgb_ref, nir_ref, wp_ref, bp_ref, wn_ref, bn_ref,
                     wi_ref, bi_ref, wz_ref, bz_ref,
                     f128_ref, net_ref, czrq_ref, pad_ref):
    # Fuses: AdditionFusion add + conv_pyramid conv + cnet level-0 (net/inp) convs +
    # tanh / relu epilogues + context_zqr conv, all in one pass.
    # TODO(synk): AdditionFusion / ResidualBlock / Pyramid are external; add + identity stand-ins.
    h, w = rgb_ref.shape[1], rgb_ref.shape[2]

    @pl.when(pl.program_id(0) == 0)
    def _():
        pad_ref[...] = jnp.zeros_like(pad_ref)

    fused = rgb_ref[0] + nir_ref[0]                         # bf16 fnet features
    f128 = _conv3x3(pad_ref, fused, wp_ref[...], bp_ref[...]).reshape(h, w, -1)
    f128_ref[0] = f128.astype(f128_ref.dtype)
    c128 = f128.shape[-1]
    _stage_padded(pad_ref, f128, 0)                         # staged once, read by both convs
    net = jnp.tanh(_conv3x3_staged(pad_ref, h, w, c128, wn_ref[...], bn_ref[...]))
    net_ref[0] = net.reshape(h, w, -1)
    inp = jnp.maximum(_conv3x3_staged(pad_ref, h, w, c128, wi_ref[...], bi_ref[...]), 0.0)
    czrq = _conv3x3(pad_ref, inp.reshape(h, w, -1), wz_ref[...], bz_ref[...])
    czrq_ref[0] = czrq.reshape(h, w, -1)


def _context_level_kernel(x_ref, wn_ref, bn_ref, wi_ref, bi_ref, wz_ref, bz_ref,
                          net_ref, czrq_ref, pad_ref):
    h, w, cc = x_ref.shape[1], x_ref.shape[2], x_ref.shape[3]

    @pl.when(pl.program_id(0) == 0)
    def _():
        pad_ref[...] = jnp.zeros_like(pad_ref)

    _stage_padded(pad_ref, x_ref[0], 0)
    net = jnp.tanh(_conv3x3_staged(pad_ref, h, w, cc, wn_ref[...], bn_ref[...]))
    net_ref[0] = net.reshape(h, w, -1)
    inp = jnp.maximum(_conv3x3_staged(pad_ref, h, w, cc, wi_ref[...], bi_ref[...]), 0.0)
    czrq = _conv3x3(pad_ref, inp.reshape(h, w, -1), wz_ref[...], bz_ref[...])
    czrq_ref[0] = czrq.reshape(h, w, -1)


def _corr_fused_kernel(rl_ref, nl_ref, rr_ref, nr_ref, o_ref, *, scale):
    # AdditionFusion add fused in-kernel; contraction on C for BOTH operands (no wrapper
    # transpose of the right feature map, no HBM round trip for it).
    a = (rl_ref[0] + nl_ref[0]).astype(jnp.bfloat16)        # (TH, W, C)
    b = (rr_ref[0] + nr_ref[0]).astype(jnp.bfloat16)        # (TH, W, C)
    corr = jax.lax.dot_general(a, b, (((2,), (2,)), ((0,), (0,))),
                               preferred_element_type=jnp.float32)
    o_ref[0] = (corr * scale).astype(o_ref.dtype)           # bf16 volume in HBM


def _corr_pair_kernel(l_ref, r_ref, o_ref, *, scale):
    a = l_ref[0].astype(jnp.bfloat16)                       # (TH, W, C)
    b = r_ref[0].astype(jnp.bfloat16)                       # (TH, W, C)
    corr = jax.lax.dot_general(a, b, (((2,), (2,)), ((0,), (0,))),
                               preferred_element_type=jnp.float32)
    o_ref[0] = (corr * scale).astype(o_ref.dtype)


def _update_kernel(vol_ref, flow_ref, h_ref, czrq_ref,
                   wm_ref, bm_ref, wzr_ref, bzr_ref, wq_ref, bq_ref, whd_ref, bhd_ref,
                   newh_ref, newflow_ref, up_ref, pad_ref, fpad_ref,
                   *, hd, radius, factor):
    """One fused iteration: corr lookup + motion conv + ConvGRU + flow/mask heads + upsampling."""
    H, W = h_ref.shape[1], h_ref.shape[2]
    W2 = vol_ref.shape[3]
    ncorr = 2 * radius + 1
    ff = factor * factor
    HW = H * W

    @pl.when(pl.program_id(0) == 0)
    def _():
        pad_ref[...] = jnp.zeros_like(pad_ref)               # zero borders once
        fpad_ref[...] = jnp.zeros_like(fpad_ref)

    flow_x = flow_ref[0]                                     # (H, W) f32, x-flow only (stereo)

    # ---- correlation window lookup: rel computed once, one store for all channels ----------
    # TODO(synk): CorrBlock1D multi-level bilinear pyramid lookup is external; stand-in =
    #             single-level nearest-neighbour [-r, r] window, zero out of range.
    gx = jax.lax.broadcasted_iota(jnp.float32, (H, W), 1)
    coords_x = gx + flow_x
    idx = jnp.floor(coords_x + 0.5).astype(jnp.int32)[:, :, None]          # (H, W, 1)
    lane = jax.lax.broadcasted_iota(jnp.int32, (H, W, W2), 2)
    rel = lane - idx                                                       # computed once
    vol = vol_ref[0]                                                       # (H, W, W2) bf16
    zero = jnp.zeros((), vol.dtype)
    taps = []
    for d in range(ncorr):
        taps.append(jnp.sum(jnp.where(rel == (d - radius), vol, zero),
                            axis=-1, keepdims=True))
    feat = jnp.concatenate(
        taps + [flow_x[:, :, None].astype(pad_ref.dtype),
                jnp.zeros((H, W, 1), pad_ref.dtype)],        # flow-y is identically 0 (stereo)
        axis=-1)
    pad_ref[1:H + 1, 1:W + 1, 0:ncorr + 2] = feat.astype(pad_ref.dtype)

    # ---- motion encoder: relu(conv3x3([corr, flow])), one im2col matmul --------------------
    x = jnp.maximum(_conv3x3_staged(pad_ref, H, W, ncorr + 2, wm_ref[...], bm_ref[...]), 0.0)

    h_flat = h_ref[0].reshape(HW, hd)
    czrq = czrq_ref[0].reshape(HW, 3 * hd)
    czr = czrq[:, 0:2 * hd]
    cq = czrq[:, 2 * hd:3 * hd]

    # ---- ConvGRU: convz|convr fused into one Cout=2*hd conv; sigmoid on the packed tensor ---
    # TODO(synk): BasicMultiUpdateBlock (multi-scale ConvGRU) is external; single-level stand-in.
    _stage_padded(pad_ref, h_ref[0], 0)
    _stage_padded(pad_ref, x.reshape(H, W, hd), hd)
    zr = jax.nn.sigmoid(_conv3x3_staged(pad_ref, H, W, 2 * hd, wzr_ref[...], bzr_ref[...]) + czr)
    z = zr[:, 0:hd]
    r = zr[:, hd:2 * hd]

    _stage_padded(pad_ref, (r * h_flat).reshape(H, W, hd), 0)   # x still staged at [hd:2hd]
    q = jnp.tanh(_conv3x3_staged(pad_ref, H, W, 2 * hd, wq_ref[...], bq_ref[...]) + cq)
    h_new = (1.0 - z) * h_flat + z * q
    newh_ref[0] = h_new.reshape(H, W, hd)

    # ---- flow_head | mask_head fused into one conv ------------------------------------------
    _stage_padded(pad_ref, h_new.reshape(H, W, hd), 0)
    head = _conv3x3_staged(pad_ref, H, W, hd, whd_ref[...], bhd_ref[...])
    dflow_x = head[:, 0:1]                                   # delta_flow[:, 1] forced to 0
    mask = head[:, 2:] * 0.25

    new_flow = flow_x + dflow_x.reshape(H, W)
    newflow_ref[0] = new_flow                                # lane-dense (H, W) output

    # ---- convex-combination upsampling of the x-flow ----------------------------------------
    m_parts = [mask[:, k * ff:(k + 1) * ff] for k in range(9)]
    mmax = m_parts[0]
    for k in range(1, 9):
        mmax = jnp.maximum(mmax, m_parts[k])
    exps = [jnp.exp(mk - mmax) for mk in m_parts]
    denom = exps[0]
    for k in range(1, 9):
        denom = denom + exps[k]
    inv = pl.reciprocal(denom, approx=True)                  # EUP reciprocal for the softmax denom

    fpad_ref[1:H + 1, 1:W + 1] = new_flow * float(factor)    # 2-D padded map, W in lanes
    up = jnp.zeros((HW, ff), jnp.float32)
    for k in range(9):
        dy, dx = k // 3, k % 3
        nb = fpad_ref[dy:dy + H, dx:dx + W].reshape(HW, 1)
        up = up + (exps[k] * inv) * nb
    up_ref[0] = up.reshape(H, W * ff)                        # lane-dense (H, W*ff) output


# ----------------------------------------------------------------------------------
# Wrappers around pallas_call
# ----------------------------------------------------------------------------------

# TODO(synk): tune per generation (<=40-48 MiB on v7x; 64-96 MiB usable on v5e/v6e).
_VMEM_LIMIT = 48 * 1024 * 1024


def _row_tile(h, cap=64):
    t = min(h, cap)
    while t > 1 and h % t:
        t -= 1
    return max(t, 1)


def _conv_w_col(w, dtype=jnp.bfloat16):
    """torch Conv2d weight (Cout, Cin, 3, 3) -> im2col bf16 weight (9*Cin, Cout)."""
    cout, cin = w.shape[0], w.shape[1]
    return jnp.transpose(w, (2, 3, 1, 0)).reshape(9 * cin, cout).astype(dtype)


def _bias2d(b):
    return b.reshape(1, -1).astype(jnp.float32)


def pack_params(params):
    """Pack torch-layout conv params into bf16 im2col kernel weights (once per forward)."""
    def wb(p):
        return _conv_w_col(p[0]), _bias2d(p[1])
    pk = {
        "fnet": wb(params["fnet"]),
        "pyr": wb(params["conv_pyramid"]),
        "net": [wb(p) for p in params["cnet_net"]],
        "inp": [wb(p) for p in params["cnet_inp"]],
        "zqr": [wb(p) for p in params["zqr"]],
        "motion": wb(params["motion"]),
        "q": wb(params["convq"]),
    }
    wz, bz = params["convz"]
    wr, br = params["convr"]
    pk["zr"] = (jnp.concatenate([_conv_w_col(wz), _conv_w_col(wr)], axis=-1),
                _bias2d(jnp.concatenate([bz, br])))
    wf, bf = params["flow_head"]
    wm, bm = params["mask_head"]
    pk["head"] = (jnp.concatenate([_conv_w_col(wf), _conv_w_col(wm)], axis=-1),
                  _bias2d(jnp.concatenate([bf, bm])))
    return pk


def fnet_forward(packed, args, imgs_nchw):
    """Stand-in BasicEncoder over the 4-way batched image stack; output bf16 NHWC (4N,H,W,256)."""
    x = jnp.concatenate(imgs_nchw, axis=0).astype(jnp.float32)
    n, c, hi, wi = x.shape
    f = 2 ** args.n_downsample
    h, w = hi // f, wi // f
    x = x.reshape(n, c, h, f, w, f)
    x = jnp.transpose(x, (0, 2, 4, 1, 3, 5)).reshape(n, h, w, c * f * f)   # NHWC, once
    wt, bt = packed["fnet"]
    cin = wt.shape[0] // 9
    cout = wt.shape[1]
    return pl.pallas_call(
        _fnet_kernel,
        out_shape=jax.ShapeDtypeStruct((n, h, w, cout), jnp.bfloat16),
        grid=(n,),
        in_specs=[pl.BlockSpec((1, h, w, cin), lambda i: (i, 0, 0, 0)),
                  pl.BlockSpec(wt.shape, lambda i: (0, 0)),
                  pl.BlockSpec(bt.shape, lambda i: (0, 0))],
        out_specs=pl.BlockSpec((1, h, w, cout), lambda i: (i, 0, 0, 0)),
        scratch_shapes=[pltpu.VMEM((h + 2, w + 2, cin), jnp.bfloat16)],
        compiler_params=pltpu.CompilerParams(dimension_semantics=("arbitrary",),
                                             vmem_limit_bytes=_VMEM_LIMIT),
    )(x, wt, bt)


def context_forward(packed, args, rgb_l, nir_l):
    """Fusion add + conv_pyramid + per-level cnet(net/inp)+zqr convs, fused per pyramid level."""
    n, h, w, c = rgb_l.shape
    wp, bp = packed["pyr"]
    wn0, bn0 = packed["net"][0]
    wi0, bi0 = packed["inp"][0]
    wz0, bz0 = packed["zqr"][0]
    hd0 = wn0.shape[-1]
    c128 = wp.shape[-1]
    f128, net0, czrq0 = pl.pallas_call(
        _context0_kernel,
        out_shape=(jax.ShapeDtypeStruct((n, h, w, c128), jnp.float32),
                   jax.ShapeDtypeStruct((n, h, w, hd0), jnp.float32),
                   jax.ShapeDtypeStruct((n, h, w, wz0.shape[-1]), jnp.float32)),
        grid=(n,),
        in_specs=[pl.BlockSpec((1, h, w, c), lambda i: (i, 0, 0, 0)),
                  pl.BlockSpec((1, h, w, c), lambda i: (i, 0, 0, 0)),
                  pl.BlockSpec(wp.shape, lambda i: (0, 0)),
                  pl.BlockSpec(bp.shape, lambda i: (0, 0)),
                  pl.BlockSpec(wn0.shape, lambda i: (0, 0)),
                  pl.BlockSpec(bn0.shape, lambda i: (0, 0)),
                  pl.BlockSpec(wi0.shape, lambda i: (0, 0)),
                  pl.BlockSpec(bi0.shape, lambda i: (0, 0)),
                  pl.BlockSpec(wz0.shape, lambda i: (0, 0)),
                  pl.BlockSpec(bz0.shape, lambda i: (0, 0))],
        out_specs=(pl.BlockSpec((1, h, w, c128), lambda i: (i, 0, 0, 0)),
                   pl.BlockSpec((1, h, w, hd0), lambda i: (i, 0, 0, 0)),
                   pl.BlockSpec((1, h, w, wz0.shape[-1]), lambda i: (i, 0, 0, 0))),
        scratch_shapes=[pltpu.VMEM((h + 2, w + 2, c), jnp.bfloat16)],
        compiler_params=pltpu.CompilerParams(dimension_semantics=("arbitrary",),
                                             vmem_limit_bytes=_VMEM_LIMIT),
    )(rgb_l, nir_l, wp, bp, wn0, bn0, wi0, bi0, wz0, bz0)

    net_list, czrq_list = [net0], [czrq0]
    cur = f128
    for lvl in range(1, args.n_gru_layers):
        nn_, hh, ww, cc = cur.shape
        cur = cur.reshape(nn_, hh // 2, 2, ww // 2, 2, cc).mean(axis=(2, 4))  # 2x avg-pool (once)
        h2, w2 = hh // 2, ww // 2
        wn, bn = packed["net"][lvl]
        wi, bi = packed["inp"][lvl]
        wz, bz = packed["zqr"][lvl]
        hdl = wn.shape[-1]
        net_l, czrq_l = pl.pallas_call(
            _context_level_kernel,
            out_shape=(jax.ShapeDtypeStruct((n, h2, w2, hdl), jnp.float32),
                       jax.ShapeDtypeStruct((n, h2, w2, wz.shape[-1]), jnp.float32)),
            grid=(n,),
            in_specs=[pl.BlockSpec((1, h2, w2, cc), lambda i: (i, 0, 0, 0)),
                      pl.BlockSpec(wn.shape, lambda i: (0, 0)),
                      pl.BlockSpec(bn.shape, lambda i: (0, 0)),
                      pl.BlockSpec(wi.shape, lambda i: (0, 0)),
                      pl.BlockSpec(bi.shape, lambda i: (0, 0)),
                      pl.BlockSpec(wz.shape, lambda i: (0, 0)),
                      pl.BlockSpec(bz.shape, lambda i: (0, 0))],
            out_specs=(pl.BlockSpec((1, h2, w2, hdl), lambda i: (i, 0, 0, 0)),
                       pl.BlockSpec((1, h2, w2, wz.shape[-1]), lambda i: (i, 0, 0, 0))),
            scratch_shapes=[pltpu.VMEM((h2 + 2, w2 + 2, cc), jnp.bfloat16)],
            compiler_params=pltpu.CompilerParams(dimension_semantics=("arbitrary",),
                                                 vmem_limit_bytes=_VMEM_LIMIT),
        )(cur, wn, bn, wi, bi, wz, bz)
        net_list.append(net_l)
        czrq_list.append(czrq_l)
    return net_list, czrq_list


def corr_volume_fused(rgb_l, nir_l, rgb_r, nir_r):
    n, h, w, c = rgb_l.shape
    th = _row_tile(h)
    scale = 1.0 / float(c) ** 0.5
    return pl.pallas_call(
        functools.partial(_corr_fused_kernel, scale=scale),
        out_shape=jax.ShapeDtypeStruct((n, h, w, w), jnp.bfloat16),
        grid=(n, h // th),
        in_specs=[pl.BlockSpec((1, th, w, c), lambda i, j: (i, j, 0, 0)),
                  pl.BlockSpec((1, th, w, c), lambda i, j: (i, j, 0, 0)),
                  pl.BlockSpec((1, th, w, c), lambda i, j: (i, j, 0, 0)),
                  pl.BlockSpec((1, th, w, c), lambda i, j: (i, j, 0, 0))],
        out_specs=pl.BlockSpec((1, th, w, w), lambda i, j: (i, j, 0, 0)),
        compiler_params=pltpu.CompilerParams(dimension_semantics=("parallel", "parallel"),
                                             vmem_limit_bytes=_VMEM_LIMIT),
    )(rgb_l, nir_l, rgb_r, nir_r)


def corr_volume_pair(fl, fr):
    n, h, w, c = fl.shape
    th = _row_tile(h)
    scale = 1.0 / float(c) ** 0.5
    return pl.pallas_call(
        functools.partial(_corr_pair_kernel, scale=scale),
        out_shape=jax.ShapeDtypeStruct((n, h, w, w), jnp.bfloat16),
        grid=(n, h // th),
        in_specs=[pl.BlockSpec((1, th, w, c), lambda i, j: (i, j, 0, 0)),
                  pl.BlockSpec((1, th, w, c), lambda i, j: (i, j, 0, 0))],
        out_specs=pl.BlockSpec((1, th, w, w), lambda i, j: (i, j, 0, 0)),
        compiler_params=pltpu.CompilerParams(dimension_semantics=("parallel", "parallel"),
                                             vmem_limit_bytes=_VMEM_LIMIT),
    )(fl, fr)


def update_step(packed, args, vol, flow, net0, czrq0):
    n, h, w, hd = net0.shape
    f = 2 ** args.n_downsample
    ff = f * f
    wm, bm = packed["motion"]
    wzr, bzr = packed["zr"]
    wq, bq = packed["q"]
    whd, bhd = packed["head"]
    w2 = vol.shape[-1]
    cpad = max(2 * hd, 2 * args.corr_radius + 3)
    kern = functools.partial(_update_kernel, hd=hd, radius=args.corr_radius, factor=f)
    # TODO(synk): add H-band tiling with a 1-row halo (Element blocks / manual DMA) for realistic
    # resolutions on v7x; whole-map blocks are fine for the /4-resolution demo maps.
    return pl.pallas_call(
        kern,
        out_shape=(jax.ShapeDtypeStruct((n, h, w, hd), jnp.float32),
                   jax.ShapeDtypeStruct((n, h, w), jnp.float32),
                   jax.ShapeDtypeStruct((n, h, w * ff), jnp.float32)),
        grid=(n,),
        in_specs=[pl.BlockSpec((1, h, w, w2), lambda i: (i, 0, 0, 0)),
                  pl.BlockSpec((1, h, w), lambda i: (i, 0, 0)),
                  pl.BlockSpec((1, h, w, hd), lambda i: (i, 0, 0, 0)),
                  pl.BlockSpec((1, h, w, 3 * hd), lambda i: (i, 0, 0, 0)),
                  pl.BlockSpec(wm.shape, lambda i: (0, 0)),
                  pl.BlockSpec(bm.shape, lambda i: (0, 0)),
                  pl.BlockSpec(wzr.shape, lambda i: (0, 0)),
                  pl.BlockSpec(bzr.shape, lambda i: (0, 0)),
                  pl.BlockSpec(wq.shape, lambda i: (0, 0)),
                  pl.BlockSpec(bq.shape, lambda i: (0, 0)),
                  pl.BlockSpec(whd.shape, lambda i: (0, 0)),
                  pl.BlockSpec(bhd.shape, lambda i: (0, 0))],
        out_specs=(pl.BlockSpec((1, h, w, hd), lambda i: (i, 0, 0, 0)),
                   pl.BlockSpec((1, h, w), lambda i: (i, 0, 0)),
                   pl.BlockSpec((1, h, w * ff), lambda i: (i, 0, 0))),
        scratch_shapes=[pltpu.VMEM((h + 2, w + 2, cpad), jnp.bfloat16),
                        pltpu.VMEM((h + 2, w + 2), jnp.float32)],
        compiler_params=pltpu.CompilerParams(dimension_semantics=("arbitrary",),
                                             vmem_limit_bytes=_VMEM_LIMIT),
    )(vol, flow, net0, czrq0, wm, bm, wzr, bzr, wq, bq, whd, bhd)


def _assemble_flow_up(up, factor):
    """(N, H, W*f*f) per-pixel convex upsample -> (N, 1, f*H, f*W) flow image (x channel)."""
    n, h, wff = up.shape
    w = wff // (factor * factor)
    u = up.reshape(n, h, w, factor, factor)
    u = jnp.transpose(u, (0, 1, 3, 2, 4)).reshape(n, h * factor, w * factor)
    return u[:, None, :, :]


# ----------------------------------------------------------------------------------
# Module configuration / parameters (deterministic, in-script)
# ----------------------------------------------------------------------------------

@dataclasses.dataclass
class Args:
    hidden_dims: tuple = (32, 32)
    n_gru_layers: int = 2
    n_downsample: int = 2
    corr_radius: int = 4
    corr_levels: int = 2
    corr_implementation: str = "reg"
    fusion: str = "add"
    shared_backbone: bool = False
    shared_fusion: bool = True
    mixed_precision: bool = False
    alter_option: str = "Fusion"      # -> only the fusion correlation block is used
    slow_fast_gru: bool = False


def init_params(key, args):
    fdim, cdim = 256, 128
    f = 2 ** args.n_downsample
    keys = iter(jax.random.split(key, 32))

    def conv_p(cin, cout):
        k = next(keys)
        w = jax.random.normal(k, (cout, cin, 3, 3), jnp.float32) / jnp.sqrt(9.0 * cin)
        b = jnp.zeros((cout,), jnp.float32)
        return (w, b)

    hd = args.hidden_dims[0]
    ncorr = 2 * args.corr_radius + 1
    return {
        "fnet": conv_p(3 * f * f, fdim),
        "conv_pyramid": conv_p(fdim, cdim),
        "cnet_net": [conv_p(cdim, args.hidden_dims[i]) for i in range(args.n_gru_layers)],
        "cnet_inp": [conv_p(cdim, args.hidden_dims[i]) for i in range(args.n_gru_layers)],
        "zqr": [conv_p(args.hidden_dims[i], args.hidden_dims[i] * 3)
                for i in range(args.n_gru_layers)],
        "motion": conv_p(ncorr + 2, hd),
        "convz": conv_p(2 * hd, hd),
        "convr": conv_p(2 * hd, hd),
        "convq": conv_p(2 * hd, hd),
        "flow_head": conv_p(hd, 2),
        "mask_head": conv_p(hd, 9 * f * f),
    }


# ----------------------------------------------------------------------------------
# Forward pass
# ----------------------------------------------------------------------------------

def raft_stereo_fusion_forward(params, args, img_rgb_l, img_rgb_r, img_nir_l, img_nir_r,
                               iters=12, flow_init=None, test_mode=False):
    packed = pack_params(params)
    f = 2 ** args.n_downsample

    def to3(x):
        return jnp.tile(x, (1, 3, 1, 1)) if x.shape[1] == 1 else x

    imgs = [to3(img_rgb_l), to3(img_rgb_r), to3(img_nir_l), to3(img_nir_r)]

    # TODO(synk): shared_backbone=True branch (cnet dual_inp / self.conv2) not implemented.
    feats = fnet_forward(packed, args, imgs)                       # (4N, H, W, 256), NHWC bf16
    fmap_rgb_l, fmap_rgb_r, fmap_nir_l, fmap_nir_r = jnp.split(feats, 4, axis=0)

    net_list, czrq_list = context_forward(packed, args, fmap_rgb_l, fmap_nir_l)

    corr_vols = []
    if args.alter_option != "Origin":
        corr_vols.append(corr_volume_fused(fmap_rgb_l, fmap_nir_l, fmap_rgb_r, fmap_nir_r))
    if args.alter_option != "Fusion":
        corr_vols.append(corr_volume_pair(fmap_nir_l, fmap_nir_r))
        if args.alter_option != "Nir":
            corr_vols.append(corr_volume_pair(fmap_rgb_l, fmap_rgb_r))

    n, h, w, _ = net_list[0].shape
    flow = jnp.zeros((n, h, w), jnp.float32)                       # coords1 - coords0, x only
    if flow_init is not None:
        # TODO(synk): y component of flow_init is dropped (stereo model keeps delta_flow_y = 0).
        flow = flow + flow_init[:, 0]

    flow_predictions = []
    flow_up = None
    for itr in range(iters):
        for vol in corr_vols:
            new_net0, flow, up = update_step(packed, args, vol, flow,
                                             net_list[0], czrq_list[0])
            net_list = [new_net0] + net_list[1:]
            if test_mode and itr < iters - 1:
                continue
            flow_up = _assemble_flow_up(up, f)
            flow_predictions.append(flow_up)

    if test_mode:
        low_flow = jnp.stack([flow, jnp.zeros_like(flow)], axis=1)  # NCHW like the reference
        return low_flow, flow_up
    return flow_predictions


# ----------------------------------------------------------------------------------
# Demo
# ----------------------------------------------------------------------------------

if __name__ == "__main__":
    args = Args()
    key = jax.random.PRNGKey(0)
    kp, k1, k2, k3, k4 = jax.random.split(key, 5)
    params = init_params(kp, args)

    img_rgb_l = jax.random.uniform(k1, (1, 3, 32, 32), jnp.float32, 0.0, 255.0)
    img_rgb_r = jax.random.uniform(k2, (1, 3, 32, 32), jnp.float32, 0.0, 255.0)
    img_nir_l = jax.random.uniform(k3, (1, 1, 32, 32), jnp.float32, 0.0, 255.0)  # 1-ch -> repeat
    img_nir_r = jax.random.uniform(k4, (1, 1, 32, 32), jnp.float32, 0.0, 255.0)

    preds = raft_stereo_fusion_forward(params, args, img_rgb_l, img_rgb_r,
                                       img_nir_l, img_nir_r, iters=2)
    preds = jax.block_until_ready(preds)
    assert len(preds) == 2 and all(p.shape == (1, 1, 32, 32) for p in preds)
    assert all(bool(jnp.all(jnp.isfinite(p))) for p in preds)
    print("KERNEL_OK")
</pallas_src>

<mosaic_0001>
module attributes {stable_mosaic.version = 11 : i64} {
  func.func @_fnet_kernel(%arg0: i32, %arg1: memref<1x8x8x48xf32, #tpu.memory_space<vmem>>, %arg2: memref<432x256xbf16, #tpu.memory_space<vmem>>, %arg3: memref<1x256xf32, #tpu.memory_space<vmem>>, %arg4: memref<1x8x8x256xbf16, #tpu.memory_space<vmem>>, %arg5: memref<10x10x48xbf16, #tpu.memory_space<vmem>>) attributes {dimension_semantics = [#tpu.dimension_semantics<arbitrary>], iteration_bounds = array<i64: 4>, scalar_prefetch = 0 : i64, scratch_operands = 1 : i64, tpu.core_type = #tpu.core_type<tc>, window_params = [{transform_indices = @transform_0, window_bounds = array<i64: 1, 8, 8, 48>}, {pipeline_mode = #tpu.pipeline_mode<synchronous>, transform_indices = @transform_1, window_bounds = array<i64: 432, 256>}, {pipeline_mode = #tpu.pipeline_mode<synchronous>, transform_indices = @transform_2, window_bounds = array<i64: 1, 256>}, {transform_indices = @transform_3, window_bounds = array<i64: 1, 8, 8, 256>}]} {
    %c0_i32 = arith.constant 0 : i32
    %0 = arith.cmpi eq, %arg0, %c0_i32 : i32
    %1 = arith.extui %0 : i1 to i32
    %c0_i32_0 = arith.constant 0 : i32
    %2 = arith.cmpi ne, %1, %c0_i32_0 : i32
    scf.if %2 {
      %cst_43 = arith.constant 0.000000e+00 : bf16
      %34 = vector.broadcast %cst_43 : bf16 to vector<10x10x48xbf16>
      %c0_44 = arith.constant 0 : index
      %c0_45 = arith.constant 0 : index
      %c0_46 = arith.constant 0 : index
      %35 = vector.load %arg5[%c0_44, %c0_45, %c0_46] : memref<10x10x48xbf16, #tpu.memory_space<vmem>>, vector<10x10x48xbf16>
      tpu.vector_store %arg5[%c0_44, %c0_45, %c0_46], %34 {strides = array<i32>} : memref<10x10x48xbf16, #tpu.memory_space<vmem>>, vector<10x10x48xbf16>,
    } else {
    }
    %c0 = arith.constant 0 : index
    %c0_1 = arith.constant 0 : index
    %c0_2 = arith.constant 0 : index
    %c0_3 = arith.constant 0 : index
    %3 = vector.load %arg1[%c0, %c0_1, %c0_2, %c0_3] : memref<1x8x8x48xf32, #tpu.memory_space<vmem>>, vector<1x8x8x48xf32>
    %4 = vector.shape_cast %3 : vector<1x8x8x48xf32> to vector<8x8x48xf32>
    %cst = arith.constant 0.00392156886 : f32
    %5 = vector.broadcast %cst : f32 to vector<8x8x48xf32>
    %6 = arith.mulf %4, %5 : vector<8x8x48xf32>
    %cst_4 = arith.constant 2.000000e+00 : f32
    %7 = vector.broadcast %cst_4 : f32 to vector<8x8x48xf32>
    %8 = arith.mulf %7, %6 : vector<8x8x48xf32>
    %cst_5 = arith.constant 1.000000e+00 : f32
    %9 = vector.broadcast %cst_5 : f32 to vector<8x8x48xf32>
    %10 = arith.subf %8, %9 : vector<8x8x48xf32>
    %c0_6 = arith.constant 0 : index
    %c0_7 = arith.constant 0 : index
    %11 = vector.load %arg2[%c0_6, %c0_7] : memref<432x256xbf16, #tpu.memory_space<vmem>>, vector<432x256xbf16>
    %c0_8 = arith.constant 0 : index
    %c0_9 = arith.constant 0 : index
    %12 = vector.load %arg3[%c0_8, %c0_9] : memref<1x256xf32, #tpu.memory_space<vmem>>, vector<1x256xf32>
    %13 = arith.truncf %10 : vector<8x8x48xf32> to vector<8x8x48xbf16>
    %c1 = arith.constant 1 : index
    %c1_10 = arith.constant 1 : index
    %c0_11 = arith.constant 0 : index
    %14 = vector.load %arg5[%c1, %c1_10, %c0_11] : memref<10x10x48xbf16, #tpu.memory_space<vmem>>, vector<8x8x48xbf16>
    tpu.vector_store %arg5[%c1, %c1_10, %c0_11], %13 {strides = array<i32>} : memref<10x10x48xbf16, #tpu.memory_space<vmem>>, vector<8x8x48xbf16>,
    %c0_12 = arith.constant 0 : index
    %c0_13 = arith.constant 0 : index
    %c0_14 = arith.constant 0 : index
    %15 = vector.load %arg5[%c0_12, %c0_13, %c0_14] : memref<10x10x48xbf16, #tpu.memory_space<vmem>>, vector<8x8x48xbf16>
    %c0_15 = arith.constant 0 : index
    %c1_16 = arith.constant 1 : index
    %c0_17 = arith.constant 0 : index
    %16 = vector.load %arg5[%c0_15, %c1_16, %c0_17] : memref<10x10x48xbf16, #tpu.memory_space<vmem>>, vector<8x8x48xbf16>
    %c0_18 = arith.constant 0 : index
    %c2 = arith.constant 2 : index
    %c0_19 = arith.constant 0 : index
    %17 = vector.load %arg5[%c0_18, %c2, %c0_19] : memref<10x10x48xbf16, #tpu.memory_space<vmem>>, vector<8x8x48xbf16>
    %c1_20 = arith.constant 1 : index
    %c0_21 = arith.constant 0 : index
    %c0_22 = arith.constant 0 : index
    %18 = vector.load %arg5[%c1_20, %c0_21, %c0_22] : memref<10x10x48xbf16, #tpu.memory_space<vmem>>, vector<8x8x48xbf16>
    %c1_23 = arith.constant 1 : index
    %c1_24 = arith.constant 1 : index
    %c0_25 = arith.constant 0 : index
    %19 = vector.load %arg5[%c1_23, %c1_24, %c0_25] : memref<10x10x48xbf16, #tpu.memory_space<vmem>>, vector<8x8x48xbf16>
    %c1_26 = arith.constant 1 : index
    %c2_27 = arith.constant 2 : index
    %c0_28 = arith.constant 0 : index
    %20 = vector.load %arg5[%c1_26, %c2_27, %c0_28] : memref<10x10x48xbf16, #tpu.memory_space<vmem>>, vector<8x8x48xbf16>
    %c2_29 = arith.constant 2 : index
    %c0_30 = arith.constant 0 : index
    %c0_31 = arith.constant 0 : index
    %21 = vector.load %arg5[%c2_29, %c0_30, %c0_31] : memref<10x10x48xbf16, #tpu.memory_space<vmem>>, vector<8x8x48xbf16>
    %c2_32 = arith.constant 2 : index
    %c1_33 = arith.constant 1 : index
    %c0_34 = arith.constant 0 : index
    %22 = vector.load %arg5[%c2_32, %c1_33, %c0_34] : memref<10x10x48xbf16, #tpu.memory_space<vmem>>, vector<8x8x48xbf16>
    %c2_35 = arith.constant 2 : index
    %c2_36 = arith.constant 2 : index
    %c0_37 = arith.constant 0 : index
    %23 = vector.load %arg5[%c2_35, %c2_36, %c0_37] : memref<10x10x48xbf16, #tpu.memory_space<vmem>>, vector<8x8x48xbf16>
    %24 = tpu.concatenate %15, %16, %17, %18, %19, %20, %21, %22, %23 in 2 : vector<8x8x48xbf16>, vector<8x8x48xbf16>, vector<8x8x48xbf16>, vector<8x8x48xbf16>, vector<8x8x48xbf16>, vector<8x8x48xbf16>, vector<8x8x48xbf16>, vector<8x8x48xbf16>, vector<8x8x48xbf16> -> vector<8x8x432xbf16>
    %25 = vector.shape_cast %24 : vector<8x8x432xbf16> to vector<64x432xbf16>
    %cst_38 = arith.constant dense<0.000000e+00> : vector<64x256xf32>
    %26 = tpu.matmul %25, %11, %cst_38 {dimension_numbers = #tpu.dot_dimension_numbers<[1], [0], [0], [1], [0, 0, 1, 1], [], []>} : vector<64x432xbf16>, vector<432x256xbf16>, vector<64x256xf32> -> vector<64x256xf32>
    %27 = vector.broadcast %12 : vector<1x256xf32> to vector<64x256xf32>
    %28 = arith.addf %26, %27 : vector<64x256xf32>
    %29 = vector.shape_cast %28 : vector<64x256xf32> to vector<8x8x256xf32>
    %30 = arith.truncf %29 : vector<8x8x256xf32> to vector<8x8x256xbf16>
    %c0_39 = arith.constant 0 : index
    %c0_40 = arith.constant 0 : index
    %c0_41 = arith.constant 0 : index
    %c0_42 = arith.constant 0 : index
    %31 = vector.load %arg4[%c0_39, %c0_40, %c0_41, %c0_42] : memref<1x8x8x256xbf16, #tpu.memory_space<vmem>>, vector<1x8x8x256xbf16>
    %32 = vector.shape_cast %31 : vector<1x8x8x256xbf16> to vector<8x8x256xbf16>
    %33 = vector.shape_cast %30 : vector<8x8x256xbf16> to vector<1x8x8x256xbf16>
    tpu.vector_store %arg4[%c0_39, %c0_40, %c0_41, %c0_42], %33 {strides = array<i32>} : memref<1x8x8x256xbf16, #tpu.memory_space<vmem>>, vector<1x8x8x256xbf16>,
    return
  }
  func.func @transform_0(%arg0: i32) -> (i32, i32, i32, i32) {
    %c0_i32 = arith.constant 0 : i32
    %c0_i32_0 = arith.constant 0 : i32
    %c0_i32_1 = arith.constant 0 : i32
    %c0_i32_2 = arith.constant 0 : i32
    return %arg0, %c0_i32, %c0_i32_0, %c0_i32_1 : i32, i32, i32, i32
  }
  func.func @transform_1(%arg0: i32) -> (i32, i32) {
    %c0_i32 = arith.constant 0 : i32
    %c0_i32_0 = arith.constant 0 : i32
    %c0_i32_1 = arith.constant 0 : i32
    return %c0_i32, %c0_i32_0 : i32, i32
  }
  func.func @transform_2(%arg0: i32) -> (i32, i32) {
    %c0_i32 = arith.constant 0 : i32
    %c0_i32_0 = arith.constant 0 : i32
    %c0_i32_1 = arith.constant 0 : i32
    return %c0_i32, %c0_i32_0 : i32, i32
  }
  func.func @transform_3(%arg0: i32) -> (i32, i32, i32, i32) {
    %c0_i32 = arith.constant 0 : i32
    %c0_i32_0 = arith.constant 0 : i32
    %c0_i32_1 = arith.constant 0 : i32
    %c0_i32_2 = arith.constant 0 : i32
    return %arg0, %c0_i32, %c0_i32_0, %c0_i32_1 : i32, i32, i32, i32
  }
}

</mosaic_0001>

<llo_original>
// kernel: tpu_custom_call.1
$region0: #{tpu_custom_call.1}
  #allocation0 [shape = 'u32[]', space=smem, size = 0x4, offset = 0x4, fixed_abs, tag = 'smem constant byte address 0x4 - core index']
  #allocation1 [shape = 'u32[72,128]{1,0:T(1,128)}', space=vmem, size = 0x9000, scoped, tag = 'internal scratch']
  #allocation2 [shape = 'bf16[10,10,48]{2,1,0:T(8,128)(2,1)}', space=vmem, size = 0xa000, scoped, tag = 'scratch operand']
  %s0 = inlined_call_operand.hbm [shape: f32[4,8,8,48], index: 0, kind: input, shape index: {}]
  %s1 = inlined_call_operand.hbm [shape: bf16[432,256], index: 1, kind: input, shape index: {}]
  %s2 = inlined_call_operand.hbm [shape: f32[1,256], index: 2, kind: input, shape index: {}]
  %s3 = inlined_call_operand.hbm [shape: bf16[4,8,8,256], index: 3, kind: output, shape index: {}]
  %s4 = sld [smem:[#allocation0]]
  $region61: #{tpu_custom_call.1} parent=0
    _
  %s6 = ssub.s32 1, %s4
  %s7 = scalar_select 0, %s6, %s4
  $region1: #{tpu_custom_call.1} parent=0
    #allocation3 [shape = 'u8[65536]{0}', space=vmem, size = 0x10000, scoped, tag = 'input window, operand 0']
    #allocation4 [shape = 's32[2]{0}', space=sflag, size = 0x8, scoped, tag = 'scoped memory for tpu_custom_call.1']
    #allocation5 [shape = 's32[2]{0}', space=sflag, size = 0x8, scoped, tag = 'scoped memory for tpu_custom_call.1']
    #allocation6 [shape = 'u8[221184]{0}', space=vmem, size = 0x36000, scoped, tag = 'input window, operand 1, single buffered']
    #allocation7 [shape = 's32[1]{0}', space=sflag, size = 0x4, scoped, tag = 'scoped memory for tpu_custom_call.1']
    #allocation8 [shape = 'u8[1024]{0}', space=vmem, size = 0x400, scoped, tag = 'input window, operand 2, single buffered']
    #allocation9 [shape = 'u8[65536]{0}', space=vmem, size = 0x10000, scoped, tag = 'output window, operand 0']
    %8 = vsyncpa [#allocation4], 0
    %s9 = scalar_lea.sflag [#allocation4], 1
    %10 = vsyncpa %s9, 0
    %11 = vsyncpa [#allocation7], 0
    %12 = vsyncpa [#allocation5], 0
    %s13 = scalar_lea.sflag [#allocation5], 1
    %14 = vsyncpa %s13, 0
    loop: start=0, step=1, limit=6
    $region2: #{tpu_custom_call.1} parent=1 // loop_pre_header
      _
    $region3: #{tpu_custom_call.1} parent=1 // loop_header
      %s16 = sphi 0, %s20
      %p17 = scmp.ge.s32.totalorder %s16, 6
      %s26 = sphi 0, %s28
      %s29 = sphi 0, %s26
      %s30 = sphi 0, %s29
      %s46 = sphi 0, %s30
      %s50 = sphi 0, %s50
      %s52 = sphi 0, %s50
      %s53 = sphi 0, %s52
      %s67 = sphi 0, %s53
      %s71 = sphi 0, %s71
      %s73 = sphi 0, %s71
      %s74 = sphi 0, %s73
      %s88 = sphi 0, %s74
      %s94 = sphi 0, %s96
      %s97 = sphi 0, %s94
      %s98 = sphi 0, %s97
      %s114 = sphi 0, %s98
    $region4: #{tpu_custom_call.1} parent=1 // loop_header_branch
      %19 = sbr.rel (%p17) target = $region8
    $region5: #{tpu_custom_call.1} parent=1 // loop_body
      %s21 = ssub.s32 %s16, 1
      %s22 = ssub.s32 %s16, 2
      %s23 = sadd.s32 %s16, 1
      %s24 = ssub.s32 %s16, %s23
      %p25 = scmp.eq.s32.totalorder %s24, 0
      %s27 = sadd.s32 %s26, 1
      %s28 = scalar_select %p25, %s26, %s27
      %p31 = pneg %p25
      %p32 = scmp.eq.s32.totalorder %s16, 3
      %p33 = por %p31, %p32
      %p34 = scmp.ne.s32.totalorder %s26, %s29
      %p35 = scmp.eq.s32.totalorder %s16, 0
      %p36 = por %p34, %p35
      %p37 = scmp.ne.s32.totalorder %s26, %s29
      %p38 = scmp.eq.s32.totalorder %s21, 3
      %p39 = por %p37, %p38
      %p40 = scmp.ne.s32.totalorder %s29, %s30
      %p41 = scmp.eq.s32.totalorder %s21, 0
      %p42 = por %p40, %p41
      %p43 = scmp.ne.s32.totalorder %s29, %s30
      %p44 = scmp.eq.s32.totalorder %s22, 3
      %p45 = por %p43, %p44
      %p47 = scmp.ne.s32.totalorder %s30, %s46
      %p48 = scmp.eq.s32.totalorder %s22, 0
      %p49 = por %p47, %p48
      %s51 = sadd.s32 %s50, 1
      %p54 = scmp.eq.s32.totalorder %s16, 3
      %p55 = scmp.ne.s32.totalorder %s50, %s52
      %p56 = scmp.eq.s32.totalorder %s16, 0
      %p57 = por %p55, %p56
      %p58 = scmp.ne.s32.totalorder %s50, %s52
      %p59 = scmp.eq.s32.totalorder %s21, 3
      %p60 = por %p58, %p59
      %p61 = scmp.ne.s32.totalorder %s52, %s53
      %p62 = scmp.eq.s32.totalorder %s21, 0
      %p63 = por %p61, %p62
      %p64 = scmp.ne.s32.totalorder %s52, %s53
      %p65 = scmp.eq.s32.totalorder %s22, 3
      %p66 = por %p64, %p65
      %p68 = scmp.ne.s32.totalorder %s53, %s67
      %p69 = scmp.eq.s32.totalorder %s22, 0
      %p70 = por %p68, %p69
      %s72 = sadd.s32 %s71, 1
      %p75 = scmp.eq.s32.totalorder %s16, 3
      %p76 = scmp.ne.s32.totalorder %s71, %s73
      %p77 = scmp.eq.s32.totalorder %s16, 0
      %p78 = por %p76, %p77
      %p79 = scmp.ne.s32.totalorder %s71, %s73
      %p80 = scmp.eq.s32.totalorder %s21, 3
      %p81 = por %p79, %p80
      %p82 = scmp.ne.s32.totalorder %s73, %s74
      %p83 = scmp.eq.s32.totalorder %s21, 0
      %p84 = por %p82, %p83
      %p85 = scmp.ne.s32.totalorder %s73, %s74
      %p86 = scmp.eq.s32.totalorder %s22, 3
      %p87 = por %p85, %p86
      %p89 = scmp.ne.s32.totalorder %s74, %s88
      %p90 = scmp.eq.s32.totalorder %s22, 0
      %p91 = por %p89, %p90
      %s92 = ssub.s32 %s16, %s23
      %p93 = scmp.eq.s32.totalorder %s92, 0
      %s95 = sadd.s32 %s94, 1
      %s96 = scalar_select %p93, %s94, %s95
      %p99 = pneg %p93
      %p100 = scmp.eq.s32.totalorder %s16, 3
      %p101 = por %p99, %p100
      %p102 = scmp.ne.s32.totalorder %s94, %s97
      %p103 = scmp.eq.s32.totalorder %s16, 0
      %p104 = por %p102, %p103
      %p105 = scmp.ne.s32.totalorder %s94, %s97
      %p106 = scmp.eq.s32.totalorder %s21, 3
      %p107 = por %p105, %p106
      %p108 = scmp.ne.s32.totalorder %s97, %s98
      %p109 = scmp.eq.s32.totalorder %s21, 0
      %p110 = por %p108, %p109
      %p111 = scmp.ne.s32.totalorder %s97, %s98
      %p112 = scmp.eq.s32.totalorder %s22, 3
      %p113 = por %p111, %p112
      %p115 = scmp.ne.s32.totalorder %s98, %s114
      %p116 = scmp.eq.s32.totalorder %s22, 0
      %p117 = por %p115, %p116
      %p118 = scmp.le.s32.totalorder 1, %s16
      %p119 = scmp.lt.s32.totalorder %s16, 5
      %p120 = pnand %p118, %p119
      %p121 = pneg %p120
      // Predicated region
      $region9: #{tpu_custom_call.1} parent=5 // pred_check
        _
      $region10: #{tpu_custom_call.1} parent=5 // pred_check_branch
        %123 = sbr.rel (%p120) target = $region12
      $region11: #{tpu_custom_call.1} parent=5 // pred_region
        %s124 = ssub.s32 %s16, 1
        // Predicated region
        $region13: #{tpu_custom_call.1} parent=11 // pred_check
          %p125 = pneg %p63
        $region14: #{tpu_custom_call.1} parent=11 // pred_check_branch
          %127 = sbr.rel (%p125) target = $region16
        $region15: #{tpu_custom_call.1} parent=11 // pred_region
          %129 = vsyncadd [#allocation7], 0
          %s130 = sshll.u32 %s1, 4
          %s131 = int_to_ptr.hbm [resolvable:$true] %s130
          %s132 = sshll.u32 [#allocation6], 4
          %s133 = int_to_ptr.vmem [resolvable:$true] %s132
          %138 = dma.hbm_to_vmem [thread:$0]  %s131, 6912, %s133, [#allocation7], 128, 128, 8
        $region16: #{tpu_custom_call.1} parent=11 // pred_fallthru
          _
        // Predicated region
        $region17: #{tpu_custom_call.1} parent=11 // pred_check
          %p139 = pneg %p84
        $region18: #{tpu_custom_call.1} parent=11 // pred_check_branch
          %141 = sbr.rel (%p139) target = $region20
        $region19: #{tpu_custom_call.1} parent=11 // pred_region
          %143 = vsyncadd [#allocation7], 0
          %s145 = sshll.u32 %s2, 4
          %s146 = int_to_ptr.hbm [resolvable:$true] %s145
          %s147 = sshll.u32 [#allocation8], 4
          %s148 = int_to_ptr.vmem [resolvable:$true] %s147
          %150 = dma.hbm_to_vmem [thread:$0]  %s146, 32, %s148, [#allocation7]
        $region20: #{tpu_custom_call.1} parent=11 // pred_fallthru
          _
      $region12: #{tpu_custom_call.1} parent=5 // pred_fallthru
        _
      %p151 = scmp.lt.s32.totalorder %s16, 4
      // Predicated region
      $region21: #{tpu_custom_call.1} parent=5 // pred_check
        %p152 = pneg %p151
      $region22: #{tpu_custom_call.1} parent=5 // pred_check_branch
        %154 = sbr.rel (%p152) target = $region24
      $region23: #{tpu_custom_call.1} parent=5 // pred_region
        // Predicated region
        $region25: #{tpu_custom_call.1} parent=23 // pred_check
          %p155 = pneg %p36
        $region26: #{tpu_custom_call.1} parent=23 // pred_check_branch
          %157 = sbr.rel (%p155) target = $region28
        $region27: #{tpu_custom_call.1} parent=23 // pred_region
          %s158 = sand.u32 %s26, 1
          %s159 = scalar_lea.sflag [#allocation4], %s158
          %s160 = sand.u32 %s26, 1
          %s161 = smul.addr %s160, 64
          %s162 = scalar_lea.vmem [#allocation3], %s161
          %164 = vsyncadd %s159, 0
          %s165 = smul.addr %s16, 8
          %s166 = smul.addr %s165, 8
          %s167 = scalar_lea.hbm %s0, %s166
          %s168 = sshll.u32 %s167, 4
          %s169 = int_to_ptr.hbm [resolvable:$true] %s168
          %s170 = sshll.u32 %s162, 4
          %s171 = int_to_ptr.vmem [resolvable:$true] %s170
          %176 = dma.hbm_to_vmem [thread:$0]  %s169, 1024, %s171, %s159, 128, 128, 8
        $region28: #{tpu_custom_call.1} parent=23 // pred_fallthru
          _
      $region24: #{tpu_custom_call.1} parent=5 // pred_fallthru
        _
      %p177 = scmp.le.s32.totalorder 1, %s16
      %p178 = scmp.lt.s32.totalorder %s16, 5
      %p179 = pnand %p177, %p178
      %p180 = pneg %p179
      // Predicated region
      $region29: #{tpu_custom_call.1} parent=5 // pred_check
        _
      $region30: #{tpu_custom_call.1} parent=5 // pred_check_branch
        %182 = sbr.rel (%p179) target = $region32
      $region31: #{tpu_custom_call.1} parent=5 // pred_region
        %s183 = ssub.s32 %s16, 1
        %s184 = sand.u32 %s29, 1
        %s185 = scalar_lea.sflag [#allocation4], %s184
        %s186 = sand.u32 %s29, 1
        %s187 = smul.addr %s186, 64
        %s188 = scalar_lea.vmem [#allocation3], %s187
        // Predicated region
        $region33: #{tpu_custom_call.1} parent=31 // pred_check
          %p189 = pneg %p42
        $region34: #{tpu_custom_call.1} parent=31 // pred_check_branch
          %191 = sbr.rel (%p189) target = $region36
        $region35: #{tpu_custom_call.1} parent=31 // pred_region
          %193 = dma.done %s185, 1024
        $region36: #{tpu_custom_call.1} parent=31 // pred_fallthru
          _
        // Predicated region
        $region37: #{tpu_custom_call.1} parent=31 // pred_check
          %p194 = pneg %p63
        $region38: #{tpu_custom_call.1} parent=31 // pred_check_branch
          %196 = sbr.rel (%p194) target = $region40
        $region39: #{tpu_custom_call.1} parent=31 // pred_region
          %198 = dma.done [#allocation7], 6912
        $region40: #{tpu_custom_call.1} parent=31 // pred_fallthru
          _
        // Predicated region
        $region41: #{tpu_custom_call.1} parent=31 // pred_check
          %p199 = pneg %p84
        $region42: #{tpu_custom_call.1} parent=31 // pred_check_branch
          %201 = sbr.rel (%p199) target = $region44
        $region43: #{tpu_custom_call.1} parent=31 // pred_region
          %203 = dma.done [#allocation7], 32
        $region44: #{tpu_custom_call.1} parent=31 // pred_fallthru
          _
        %s204 = sand.u32 %s29, 1
        %s205 = scalar_lea.sflag [#allocation4], %s204
        %s206 = sand.u32 %s29, 1
        %s207 = smul.addr %s206, 64
        %s208 = scalar_lea.vmem [#allocation3], %s207
        %p209 = pneg %p42
        %p210 = pneg %p39
        %p211 = pneg %p63
        %p212 = pneg %p60
        %p213 = pneg %p84
        %p214 = pneg %p81
        %p215 = pneg %p110
        %p216 = pneg %p107
        %s217 = sand.u32 %s97, 1
        %s218 = scalar_lea.sflag [#allocation5], %s217
        %s219 = sand.u32 %s97, 1
        %s220 = smul.addr %s219, 64
        %s221 = scalar_lea.vmem [#allocation9], %s220
        %p223 = scmp.eq.s32.totalorder %s21, 0
        // Predicated region
        $region45: #{tpu_custom_call.1} parent=31 // pred_check
          %p224 = pneg %p223
        $region46: #{tpu_custom_call.1} parent=31 // pred_check_branch
          %226 = sbr.rel (%p224) target = $region48
        $region47: #{tpu_custom_call.1} parent=31 // pred_region
          %vm227 = vcmask 388096
          %228 = vst.msk [vmem:[#allocation2] sm:$0xf] %vm227, 0
          %vm229 = vcmask 385024
          %230 = vst.msk [vmem:[#allocation2 + $0x4] sm:$0x1] %vm229, 0
          %231 = vst.msk [vmem:[#allocation2 + $0x8] sm:$0xf] %vm227, 0
          %232 = vst.msk [vmem:[#allocation2 + $0xc] sm:$0x1] %vm229, 0
          %233 = vst.msk [vmem:[#allocation2 + $0x10] sm:$0xf] %vm227, 0
          %234 = vst.msk [vmem:[#allocation2 + $0x14] sm:$0x1] %vm229, 0
          %235 = vst.msk [vmem:[#allocation2 + $0x18] sm:$0xf] %vm227, 0
          %236 = vst.msk [vmem:[#allocation2 + $0x1c] sm:$0x1] %vm229, 0
          %237 = vst.msk [vmem:[#allocation2 + $0x20] sm:$0xf] %vm227, 0
          %238 = vst.msk [vmem:[#allocation2 + $0x24] sm:$0x1] %vm229, 0
          %239 = vst.msk [vmem:[#allocation2 + $0x28] sm:$0xf] %vm227, 0
          %240 = vst.msk [vmem:[#allocation2 + $0x2c] sm:$0x1] %vm229, 0
          %241 = vst.msk [vmem:[#allocation2 + $0x30] sm:$0xf] %vm227, 0
          %242 = vst.msk [vmem:[#allocation2 + $0x34] sm:$0x1] %vm229, 0
          %243 = vst.msk [vmem:[#allocation2 + $0x38] sm:$0xf] %vm227, 0
          %244 = vst.msk [vmem:[#allocation2 + $0x3c] sm:$0x1] %vm229, 0
          %245 = vst.msk [vmem:[#allocation2 + $0x40] sm:$0xf] %vm227, 0
          %246 = vst.msk [vmem:[#allocation2 + $0x44] sm:$0x1] %vm229, 0
          %247 = vst.msk [vmem:[#allocation2 + $0x48] sm:$0xf] %vm227, 0
          %248 = vst.msk [vmem:[#allocation2 + $0x4c] sm:$0x1] %vm229, 0
        $region48: #{tpu_custom_call.1} parent=31 // pred_fallthru
          _
        %v249 = vld [vmem:[%s188] sm:$0xff]
        %v250 = vld [vmem:[%s188 + $0x8] sm:$0xff]
        %v251 = vld [vmem:[%s188 + $0x10] sm:$0xff]
        %v252 = vld [vmem:[%s188 + $0x18] sm:$0xff]
        %v253 = vld [vmem:[%s188 + $0x20] sm:$0xff]
        %v254 = vld [vmem:[%s188 + $0x28] sm:$0xff]
        %v255 = vld [vmem:[%s188 + $0x30] sm:$0xff]
        %v256 = vld [vmem:[%s188 + $0x38] sm:$0xff]
        %v257 = vmul.f32 %v249, 0.003921569
        %v258 = vmul.f32 %v250, 0.003921569
        %v259 = vmul.f32 %v251, 0.003921569
        %v260 = vmul.f32 %v252, 0.003921569
        %v261 = vmul.f32 %v253, 0.003921569
        %v262 = vmul.f32 %v254, 0.003921569
        %v263 = vmul.f32 %v255, 0.003921569
        %v264 = vmul.f32 %v256, 0.003921569
        %v265 = vmul.f32 %v257, 2.0
        %v266 = vmul.f32 %v258, 2.0
        %v267 = vmul.f32 %v259, 2.0
        %v268 = vmul.f32 %v260, 2.0
        %v269 = vmul.f32 %v261, 2.0
        %v270 = vmul.f32 %v262, 2.0
        %v271 = vmul.f32 %v263, 2.0
        %v272 = vmul.f32 %v264, 2.0
        %v273 = vsub.f32 %v265, 1.0
        %v274 = vsub.f32 %v266, 1.0
        %v275 = vsub.f32 %v267, 1.0
        %v276 = vsub.f32 %v268, 1.0
        %v277 = vsub.f32 %v269, 1.0
        %v278 = vsub.f32 %v270, 1.0
        %v279 = vsub.f32 %v271, 1.0
        %v280 = vsub.f32 %v272, 1.0
        %v281 = vld [vmem:[#allocation6] sm:$0xff]
        %v282 = vld [vmem:[#allocation6 + $0x8] sm:$0xff]
        %v283 = vld [vmem:[#allocation6 + $0x10] sm:$0xff]
        %v284 = vld [vmem:[#allocation6 + $0x18] sm:$0xff]
        %v285 = vld [vmem:[#allocation6 + $0x20] sm:$0xff]
        %v286 = vld [vmem:[#allocation6 + $0x28] sm:$0xff]
        %v287 = vld [vmem:[#allocation6 + $0x30] sm:$0xff]
        %v288 = vld [vmem:[#allocation6 + $0x38] sm:$0xff]
        %v289 = vld [vmem:[#allocation6 + $0x40] sm:$0xff]
        %v290 = vld [vmem:[#allocation6 + $0x48] sm:$0xff]
        %v291 = vld [vmem:[#allocation6 + $0x50] sm:$0xff]
        %v292 = vld [vmem:[#allocation6 + $0x58] sm:$0xff]
        %v293 = vld [vmem:[#allocation6 + $0x60] sm:$0xff]
        %v294 = vld [vmem:[#allocation6 + $0x68] sm:$0xff]
        %v295 = vld [vmem:[#allocation6 + $0x70] sm:$0xff]
        %v296 = vld [vmem:[#allocation6 + $0x78] sm:$0xff]
        %v297 = vld [vmem:[#allocation6 + $0x80] sm:$0xff]
        %v298 = vld [vmem:[#allocation6 + $0x88] sm:$0xff]
        %v299 = vld [vmem:[#allocation6 + $0x90] sm:$0xff]
        %v300 = vld [vmem:[#allocation6 + $0x98] sm:$0xff]
        %v301 = vld [vmem:[#allocation6 + $0xa0] sm:$0xff]
        %v302 = vld [vmem:[#allocation6 + $0xa8] sm:$0xff]
        %v303 = vld [vmem:[#allocation6 + $0xb0] sm:$0xff]
        %v304 = vld [vmem:[#allocation6 + $0xb8] sm:$0xff]
        %v305 = vld [vmem:[#allocation6 + $0xc0] sm:$0xff]
        %v306 = vld [vmem:[#allocation6 + $0xc8] sm:$0xff]
        %v307 = vld [vmem:[#allocation6 + $0xd0] sm:$0xff]
        %v308 = vld [vmem:[#allocation6 + $0xd8] sm:$0xff]
        %v309 = vld [vmem:[#allocation6 + $0xe0] sm:$0xff]
        %v310 = vld [vmem:[#allocation6 + $0xe8] sm:$0xff]
        %v311 = vld [vmem:[#allocation6 + $0xf0] sm:$0xff]
        %v312 = vld [vmem:[#allocation6 + $0xf8] sm:$0xff]
        %v313 = vld [vmem:[#allocation6 + $0x100] sm:$0xff]
        %v314 = vld [vmem:[#allocation6 + $0x108] sm:$0xff]
        %v315 = vld [vmem:[#allocation6 + $0x110] sm:$0xff]
        %v316 = vld [vmem:[#allocation6 + $0x118] sm:$0xff]
        %v317 = vld [vmem:[#allocation6 + $0x120] sm:$0xff]
        %v318 = vld [vmem:[#allocation6 + $0x128] sm:$0xff]
        %v319 = vld [vmem:[#allocation6 + $0x130] sm:$0xff]
        %v320 = vld [vmem:[#allocation6 + $0x138] sm:$0xff]
        %v321 = vld [vmem:[#allocation6 + $0x140] sm:$0xff]
        %v322 = vld [vmem:[#allocation6 + $0x148] sm:$0xff]
        %v323 = vld [vmem:[#allocation6 + $0x150] sm:$0xff]
        %v324 = vld [vmem:[#allocation6 + $0x158] sm:$0xff]
        %v325 = vld [vmem:[#allocation6 + $0x160] sm:$0xff]
        %v326 = vld [vmem:[#allocation6 + $0x168] sm:$0xff]
        %v327 = vld [vmem:[#allocation6 + $0x170] sm:$0xff]
        %v328 = vld [vmem:[#allocation6 + $0x178] sm:$0xff]
        %v329 = vld [vmem:[#allocation6 + $0x180] sm:$0xff]
        %v330 = vld [vmem:[#allocation6 + $0x188] sm:$0xff]
        %v331 = vld [vmem:[#allocation6 + $0x190] sm:$0xff]
        %v332 = vld [vmem:[#allocation6 + $0x198] sm:$0xff]
        %v333 = vld [vmem:[#allocation6 + $0x1a0] sm:$0xff]
        %v334 = vld [vmem:[#allocation6 + $0x1a8] sm:$0xff]
        %v335 = vld [vmem:[#allocation8] sm:$0x3]
        %v336 = vpack.c.bf16 %v273, %v273
        %v337 = vpack.c.bf16 %v274, %v274
        %v338 = vpack.c.bf16 %v275, %v275
        %v339 = vpack.c.bf16 %v276, %v276
        %v340 = vpack.c.bf16 %v277, %v277
        %v341 = vpack.c.bf16 %v278, %v278
        %v342 = vpack.c.bf16 %v279, %v279
        %v343 = vpack.c.bf16 %v280, %v280
        %v345 = vshrl.u32 %v336, 16
        %v347 = vrot.slane %v345, 7
        %v348 = vshll.u32 %v336, 16
        %v350 = vor.u32 %v347, %v348
        %v351 = vrot.slane %v347, 4
        %v353 = vshrl.u32 %v337, 16
        %v355 = vrot.slane %v353, 7
        %v356 = vshll.u32 %v337, 16
        %v358 = vor.u32 %v355, %v356
        %v359 = vrot.slane %v355, 4
        %v361 = vshrl.u32 %v338, 16
        %v363 = vrot.slane %v361, 7
        %v364 = vshll.u32 %v338, 16
        %v366 = vor.u32 %v363, %v364
        %v367 = vrot.slane %v363, 4
        %v369 = vshrl.u32 %v339, 16
        %v371 = vrot.slane %v369, 7
        %v372 = vshll.u32 %v339, 16
        %v374 = vor.u32 %v371, %v372
        %v375 = vrot.slane %v371, 4
        %v377 = vshrl.u32 %v340, 16
        %v379 = vrot.slane %v377, 7
        %v380 = vshll.u32 %v340, 16
        %v382 = vor.u32 %v379, %v380
        %v383 = vrot.slane %v379, 4
        %v385 = vshrl.u32 %v341, 16
        %v387 = vrot.slane %v385, 7
        %v388 = vshll.u32 %v341, 16
        %v390 = vor.u32 %v387, %v388
        %v391 = vrot.slane %v387, 4
        %v393 = vshrl.u32 %v342, 16
        %v395 = vrot.slane %v393, 7
        %v396 = vshll.u32 %v342, 16
        %v398 = vor.u32 %v395, %v396
        %v399 = vrot.slane %v395, 4
        %v401 = vshrl.u32 %v343, 16
        %v403 = vrot.slane %v401, 7
        %v404 = vshll.u32 %v343, 16
        %v406 = vor.u32 %v403, %v404
        %v407 = vrot.slane %v403, 4
        %s424 = scalar_lea.vmem [#allocation2], 8
        %vm425 = vcmask 388096
        %vm426 = vsmask.f32 7938
        %vm427 = vmand %vm425, %vm426
        %v428 = vld [vmem:[%s424] sm:$0xf]
        %v429 = vsel %vm427, %v350, %v428
        %430 = vst [vmem:[%s424] sm:$0xf] %v429
        %vm431 = vcmask 385024
        %vm432 = vsmask.f32 256
        %vm433 = vmand %vm431, %vm432
        %v434 = vld [vmem:[%s424 + $0x4] sm:$0x1]
        %v435 = vsel %vm433, %v351, %v434
        %436 = vst [vmem:[%s424 + $0x4] sm:$0x1] %v435
        %v437 = vld [vmem:[%s424 + $0x8] sm:$0xf]
        %v438 = vsel %vm427, %v358, %v437
        %439 = vst [vmem:[%s424 + $0x8] sm:$0xf] %v438
        %v440 = vld [vmem:[%s424 + $0xc] sm:$0x1]
        %v441 = vsel %vm433, %v359, %v440
        %442 = vst [vmem:[%s424 + $0xc] sm:$0x1] %v441
        %v443 = vld [vmem:[%s424 + $0x10] sm:$0xf]
        %v444 = vsel %vm427, %v366, %v443
        %445 = vst [vmem:[%s424 + $0x10] sm:$0xf] %v444
        %v446 = vld [vmem:[%s424 + $0x14] sm:$0x1]
        %v447 = vsel %vm433, %v367, %v446
        %448 = vst [vmem:[%s424 + $0x14] sm:$0x1] %v447
        %v449 = vld [vmem:[%s424 + $0x18] sm:$0xf]
        %v450 = vsel %vm427, %v374, %v449
        %451 = vst [vmem:[%s424 + $0x18] sm:$0xf] %v450
        %v452 = vld [vmem:[%s424 + $0x1c] sm:$0x1]
        %v453 = vsel %vm433, %v375, %v452
        %454 = vst [vmem:[%s424 + $0x1c] sm:$0x1] %v453
        %v455 = vld [vmem:[%s424 + $0x20] sm:$0xf]
        %v456 = vsel %vm427, %v382, %v455
        %457 = vst [vmem:[%s424 + $0x20] sm:$0xf] %v456
        %v458 = vld [vmem:[%s424 + $0x24] sm:$0x1]
        %v459 = vsel %vm433, %v383, %v458
        %460 = vst [vmem:[%s424 + $0x24] sm:$0x1] %v459
        %v461 = vld [vmem:[%s424 + $0x28] sm:$0xf]
        %v462 = vsel %vm427, %v390, %v461
        %463 = vst [vmem:[%s424 + $0x28] sm:$0xf] %v462
        %v464 = vld [vmem:[%s424 + $0x2c] sm:$0x1]
        %v465 = vsel %vm433, %v391, %v464
        %466 = vst [vmem:[%s424 + $0x2c] sm:$0x1] %v465
        %v467 = vld [vmem:[%s424 + $0x30] sm:$0xf]
        %v468 = vsel %vm427, %v398, %v467
        %469 = vst [vmem:[%s424 + $0x30] sm:$0xf] %v468
        %v470 = vld [vmem:[%s424 + $0x34] sm:$0x1]
        %v471 = vsel %vm433, %v399, %v470
        %472 = vst [vmem:[%s424 + $0x34] sm:$0x1] %v471
        %v473 = vld [vmem:[%s424 + $0x38] sm:$0xf]
        %v474 = vsel %vm427, %v406, %v473
        %475 = vst [vmem:[%s424 + $0x38] sm:$0xf] %v474
        %v476 = vld [vmem:[%s424 + $0x3c] sm:$0x1]
        %v477 = vsel %vm433, %v407, %v476
        %478 = vst [vmem:[%s424 + $0x3c] sm:$0x1] %v477
        %v479 = vld [vmem:[#allocation2] sm:$0xf]
        %v480 = vld [vmem:[#allocation2 + $0x8] sm:$0xf]
        %v481 = vld [vmem:[#allocation2 + $0x10] sm:$0xf]
        %v482 = vld [vmem:[#allocation2 + $0x18] sm:$0xf]
        %v483 = vld [vmem:[#allocation2 + $0x20] sm:$0xf]
        %v484 = vld [vmem:[#allocation2 + $0x28] sm:$0xf]
        %v485 = vld [vmem:[#allocation2 + $0x30] sm:$0xf]
        %v486 = vld [vmem:[#allocation2 + $0x38] sm:$0xf]
        %v487 = vld [vmem:[#allocation2 + $0x4] sm:$0x1]
        %v488 = vld [vmem:[#allocation2 + $0xc] sm:$0x1]
        %v489 = vld [vmem:[#allocation2 + $0x14] sm:$0x1]
        %v490 = vld [vmem:[#allocation2 + $0x1c] sm:$0x1]
        %v491 = vld [vmem:[#allocation2 + $0x24] sm:$0x1]
        %v492 = vld [vmem:[#allocation2 + $0x2c] sm:$0x1]
        %v493 = vld [vmem:[#allocation2 + $0x34] sm:$0x1]
        %v494 = vld [vmem:[#allocation2 + $0x3c] sm:$0x1]
        %v495 = vld [vmem:[#allocation2] sm:$0xe]
        %v496 = vld [vmem:[#allocation2 + $0x8] sm:$0xe]
        %v497 = vld [vmem:[#allocation2 + $0x10] sm:$0xe]
        %v498 = vld [vmem:[#allocation2 + $0x18] sm:$0xe]
        %v499 = vld [vmem:[#allocation2 + $0x20] sm:$0xe]
        %v500 = vld [vmem:[#allocation2 + $0x28] sm:$0xe]
        %v501 = vld [vmem:[#allocation2 + $0x30] sm:$0xe]
        %v502 = vld [vmem:[#allocation2 + $0x38] sm:$0xe]
        %v503 = vld [vmem:[%s424] sm:$0xf]
        %v504 = vld [vmem:[%s424 + $0x8] sm:$0xf]
        %v505 = vld [vmem:[%s424 + $0x10] sm:$0xf]
        %v506 = vld [vmem:[%s424 + $0x18] sm:$0xf]
        %v507 = vld [vmem:[%s424 + $0x20] sm:$0xf]
        %v508 = vld [vmem:[%s424 + $0x28] sm:$0xf]
        %v509 = vld [vmem:[%s424 + $0x30] sm:$0xf]
        %v510 = vld [vmem:[%s424 + $0x38] sm:$0xf]
        %v511 = vld [vmem:[%s424 + $0x4] sm:$0x1]
        %v512 = vld [vmem:[%s424 + $0xc] sm:$0x1]
        %v513 = vld [vmem:[%s424 + $0x14] sm:$0x1]
        %v514 = vld [vmem:[%s424 + $0x1c] sm:$0x1]
        %v515 = vld [vmem:[%s424 + $0x24] sm:$0x1]
        %v516 = vld [vmem:[%s424 + $0x2c] sm:$0x1]
        %v517 = vld [vmem:[%s424 + $0x34] sm:$0x1]
        %v518 = vld [vmem:[%s424 + $0x3c] sm:$0x1]
        %v519 = vld [vmem:[%s424] sm:$0xe]
        %v520 = vld [vmem:[%s424 + $0x8] sm:$0xe]
        %v521 = vld [vmem:[%s424 + $0x10] sm:$0xe]
        %v522 = vld [vmem:[%s424 + $0x18] sm:$0xe]
        %v523 = vld [vmem:[%s424 + $0x20] sm:$0xe]
        %v524 = vld [vmem:[%s424 + $0x28] sm:$0xe]
        %v525 = vld [vmem:[%s424 + $0x30] sm:$0xe]
        %v526 = vld [vmem:[%s424 + $0x38] sm:$0xe]
        %s527 = scalar_lea.vmem [#allocation2], 16
        %v528 = vld [vmem:[%s527] sm:$0xf]
        %v529 = vld [vmem:[%s527 + $0x8] sm:$0xf]
        %v530 = vld [vmem:[%s527 + $0x10] sm:$0xf]
        %v531 = vld [vmem:[%s527 + $0x18] sm:$0xf]
        %v532 = vld [vmem:[%s527 + $0x20] sm:$0xf]
        %v533 = vld [vmem:[%s527 + $0x28] sm:$0xf]
        %v534 = vld [vmem:[%s527 + $0x30] sm:$0xf]
        %v535 = vld [vmem:[%s527 + $0x38] sm:$0xf]
        %v536 = vld [vmem:[%s527 + $0x4] sm:$0x1]
        %v537 = vld [vmem:[%s527 + $0xc] sm:$0x1]
        %v538 = vld [vmem:[%s527 + $0x14] sm:$0x1]
        %v539 = vld [vmem:[%s527 + $0x1c] sm:$0x1]
        %v540 = vld [vmem:[%s527 + $0x24] sm:$0x1]
        %v541 = vld [vmem:[%s527 + $0x2c] sm:$0x1]
        %v542 = vld [vmem:[%s527 + $0x34] sm:$0x1]
        %v543 = vld [vmem:[%s527 + $0x3c] sm:$0x1]
        %v544 = vld [vmem:[%s527] sm:$0xe]
        %v545 = vld [vmem:[%s527 + $0x8] sm:$0xe]
        %v546 = vld [vmem:[%s527 + $0x10] sm:$0xe]
        %v547 = vld [vmem:[%s527 + $0x18] sm:$0xe]
        %v548 = vld [vmem:[%s527 + $0x20] sm:$0xe]
        %v549 = vld [vmem:[%s527 + $0x28] sm:$0xe]
        %v550 = vld [vmem:[%s527 + $0x30] sm:$0xe]
        %v551 = vld [vmem:[%s527 + $0x38] sm:$0xe]
        %v568 = vunpack.c.l.b16 %v479
        %v569 = vunpack.c.l.b16 %v487
        %v570 = vunpack.c.l.b16 %v480
        %v571 = vunpack.c.l.b16 %v488
        %v572 = vunpack.c.l.b16 %v481
        %v573 = vunpack.c.l.b16 %v489
        %v574 = vunpack.c.l.b16 %v482
        %v575 = vunpack.c.l.b16 %v490
        %v576 = vunpack.c.l.b16 %v483
        %v577 = vunpack.c.l.b16 %v491
        %v578 = vunpack.c.l.b16 %v484
        %v579 = vunpack.c.l.b16 %v492
        %v580 = vunpack.c.l.b16 %v485
        %v581 = vunpack.c.l.b16 %v493
        %v582 = vunpack.c.l.b16 %v486
        %v583 = vunpack.c.l.b16 %v494
        %v584 = vpack.c.b16 %v569, %v568
        %v585 = vpack.c.b16 %v571, %v570
        %v586 = vpack.c.b16 %v573, %v572
        %v587 = vpack.c.b16 %v575, %v574
        %v588 = vpack.c.b16 %v577, %v576
        %v589 = vpack.c.b16 %v579, %v578
        %v590 = vpack.c.b16 %v581, %v580
        %v591 = vpack.c.b16 %v583, %v582
        %v593 = vshrl.u32 %v584, 16
        %v595 = vshll.u32 %v584, 16
        %v597 = vrot.slane %v595, 1
        %v598 = vor.u32 %v593, %v597
        %v600 = vshrl.u32 %v585, 16
        %v602 = vshll.u32 %v585, 16
        %v604 = vrot.slane %v602, 1
        %v605 = vor.u32 %v600, %v604
        %v607 = vshrl.u32 %v586, 16
        %v609 = vshll.u32 %v586, 16
        %v611 = vrot.slane %v609, 1
        %v612 = vor.u32 %v607, %v611
        %v614 = vshrl.u32 %v587, 16
        %v616 = vshll.u32 %v587, 16
        %v618 = vrot.slane %v616, 1
        %v619 = vor.u32 %v614, %v618
        %v621 = vshrl.u32 %v588, 16
        %v623 = vshll.u32 %v588, 16
        %v625 = vrot.slane %v623, 1
        %v626 = vor.u32 %v621, %v625
        %v628 = vshrl.u32 %v589, 16
        %v630 = vshll.u32 %v589, 16
        %v632 = vrot.slane %v630, 1
        %v633 = vor.u32 %v628, %v632
        %v635 = vshrl.u32 %v590, 16
        %v637 = vshll.u32 %v590, 16
        %v639 = vrot.slane %v637, 1
        %v640 = vor.u32 %v635, %v639
        %v642 = vshrl.u32 %v591, 16
        %v644 = vshll.u32 %v591, 16
        %v646 = vrot.slane %v644, 1
        %v647 = vor.u32 %v642, %v646
        %648 = vrot.lane.b32.xlu0 %v598, 48
        %v649 = vpop.permute.xlu0 %648
        %650 = vrot.lane.b32.xlu0 %v605, 48
        %v651 = vpop.permute.xlu0 %650
        %652 = vrot.lane.b32.xlu0 %v612, 48
        %v653 = vpop.permute.xlu0 %652
        %654 = vrot.lane.b32.xlu0 %v619, 48
        %v655 = vpop.permute.xlu0 %654
        %656 = vrot.lane.b32.xlu0 %v626, 48
        %v657 = vpop.permute.xlu0 %656
        %658 = vrot.lane.b32.xlu0 %v633, 48
        %v659 = vpop.permute.xlu0 %658
        %660 = vrot.lane.b32.xlu0 %v640, 48
        %v661 = vpop.permute.xlu0 %660
        %662 = vrot.lane.b32.xlu0 %v647, 48
        %v663 = vpop.permute.xlu0 %662
        %v672 = vunpack.c.l.b16 %v495
        %v673 = vunpack.c.l.b16 %v496
        %v674 = vunpack.c.l.b16 %v497
        %v675 = vunpack.c.l.b16 %v498
        %v676 = vunpack.c.l.b16 %v499
        %v677 = vunpack.c.l.b16 %v500
        %v678 = vunpack.c.l.b16 %v501
        %v679 = vunpack.c.l.b16 %v502
        %v680 = vpack.c.b16 %v569, %v672
        %v681 = vpack.c.b16 %v571, %v673
        %v682 = vpack.c.b16 %v573, %v674
        %v683 = vpack.c.b16 %v575, %v675
        %v684 = vpack.c.b16 %v577, %v676
        %v685 = vpack.c.b16 %v579, %v677
        %v686 = vpack.c.b16 %v581, %v678
        %v687 = vpack.c.b16 %v583, %v679
        %v688 = vrot.slane %v680, 1
        %v689 = vrot.slane %v681, 1
        %v690 = vrot.slane %v682, 1
        %v691 = vrot.slane %v683, 1
        %v692 = vrot.slane %v684, 1
        %v693 = vrot.slane %v685, 1
        %v694 = vrot.slane %v686, 1
        %v695 = vrot.slane %v687, 1
        %696 = vrot.lane.b32.xlu0 %v688, 96
        %v697 = vpop.permute.xlu0 %696
        %698 = vrot.lane.b32.xlu0 %v689, 96
        %v699 = vpop.permute.xlu0 %698
        %700 = vrot.lane.b32.xlu0 %v690, 96
        %v701 = vpop.permute.xlu0 %700
        %702 = vrot.lane.b32.xlu0 %v691, 96
        %v703 = vpop.permute.xlu0 %702
        %704 = vrot.lane.b32.xlu0 %v692, 96
        %v705 = vpop.permute.xlu0 %704
        %706 = vrot.lane.b32.xlu0 %v693, 96
        %v707 = vpop.permute.xlu0 %706
        %708 = vrot.lane.b32.xlu0 %v694, 96
        %v709 = vpop.permute.xlu0 %708
        %710 = vrot.lane.b32.xlu0 %v695, 96
        %v711 = vpop.permute.xlu0 %710
        %v720 = vunpack.c.l.b16 %v503
        %v721 = vunpack.c.l.b16 %v504
        %v722 = vunpack.c.l.b16 %v505
        %v723 = vunpack.c.l.b16 %v506
        %v724 = vunpack.c.l.b16 %v507
        %v725 = vunpack.c.l.b16 %v508
        %v726 = vunpack.c.l.b16 %v509
        %v727 = vunpack.c.l.b16 %v510
        %v728 = vpack.c.b16 %v720, %v720
        %v729 = vpack.c.b16 %v721, %v721
        %v730 = vpack.c.b16 %v722, %v722
        %v731 = vpack.c.b16 %v723, %v723
        %v732 = vpack.c.b16 %v724, %v724
        %v733 = vpack.c.b16 %v725, %v725
        %v734 = vpack.c.b16 %v726, %v726
        %v735 = vpack.c.b16 %v727, %v727
        %736 = vrot.lane.b32.xlu0 %v728, 16
        %v737 = vpop.permute.xlu0 %736
        %738 = vrot.lane.b32.xlu0 %v729, 16
        %v739 = vpop.permute.xlu0 %738
        %740 = vrot.lane.b32.xlu0 %v730, 16
        %v741 = vpop.permute.xlu0 %740
        %742 = vrot.lane.b32.xlu0 %v731, 16
        %v743 = vpop.permute.xlu0 %742
        %744 = vrot.lane.b32.xlu0 %v732, 16
        %v745 = vpop.permute.xlu0 %744
        %746 = vrot.lane.b32.xlu0 %v733, 16
        %v747 = vpop.permute.xlu0 %746
        %748 = vrot.lane.b32.xlu0 %v734, 16
        %v749 = vpop.permute.xlu0 %748
        %750 = vrot.lane.b32.xlu0 %v735, 16
        %v751 = vpop.permute.xlu0 %750
        %v760 = vunpack.c.l.b16 %v511
        %v761 = vunpack.c.l.b16 %v512
        %v762 = vunpack.c.l.b16 %v513
        %v763 = vunpack.c.l.b16 %v514
        %v764 = vunpack.c.l.b16 %v515
        %v765 = vunpack.c.l.b16 %v516
        %v766 = vunpack.c.l.b16 %v517
        %v767 = vunpack.c.l.b16 %v518
        %v768 = vpack.c.b16 %v760, %v720
        %v769 = vpack.c.b16 %v761, %v721
        %v770 = vpack.c.b16 %v762, %v722
        %v771 = vpack.c.b16 %v763, %v723
        %v772 = vpack.c.b16 %v764, %v724
        %v773 = vpack.c.b16 %v765, %v725
        %v774 = vpack.c.b16 %v766, %v726
        %v775 = vpack.c.b16 %v767, %v727
        %v777 = vshrl.u32 %v768, 16
        %v779 = vshll.u32 %v768, 16
        %v781 = vrot.slane %v779, 1
        %v782 = vor.u32 %v777, %v781
        %v784 = vshrl.u32 %v769, 16
        %v786 = vshll.u32 %v769, 16
        %v788 = vrot.slane %v786, 1
        %v789 = vor.u32 %v784, %v788
        %v791 = vshrl.u32 %v770, 16
        %v793 = vshll.u32 %v770, 16
        %v795 = vrot.slane %v793, 1
        %v796 = vor.u32 %v791, %v795
        %v798 = vshrl.u32 %v771, 16
        %v800 = vshll.u32 %v771, 16
        %v802 = vrot.slane %v800, 1
        %v803 = vor.u32 %v798, %v802
        %v805 = vshrl.u32 %v772, 16
        %v807 = vshll.u32 %v772, 16
        %v809 = vrot.slane %v807, 1
        %v810 = vor.u32 %v805, %v809
        %v812 = vshrl.u32 %v773, 16
        %v814 = vshll.u32 %v773, 16
        %v816 = vrot.slane %v814, 1
        %v817 = vor.u32 %v812, %v816
        %v819 = vshrl.u32 %v774, 16
        %v821 = vshll.u32 %v774, 16
        %v823 = vrot.slane %v821, 1
        %v824 = vor.u32 %v819, %v823
        %v826 = vshrl.u32 %v775, 16
        %v828 = vshll.u32 %v775, 16
        %v830 = vrot.slane %v828, 1
        %v831 = vor.u32 %v826, %v830
        %832 = vrot.lane.b32.xlu0 %v782, 64
        %v833 = vpop.permute.xlu0 %832
        %834 = vrot.lane.b32.xlu0 %v789, 64
        %v835 = vpop.permute.xlu0 %834
        %836 = vrot.lane.b32.xlu0 %v796, 64
        %v837 = vpop.permute.xlu0 %836
        %838 = vrot.lane.b32.xlu0 %v803, 64
        %v839 = vpop.permute.xlu0 %838
        %840 = vrot.lane.b32.xlu0 %v810, 64
        %v841 = vpop.permute.xlu0 %840
        %842 = vrot.lane.b32.xlu0 %v817, 64
        %v843 = vpop.permute.xlu0 %842
        %844 = vrot.lane.b32.xlu0 %v824, 64
        %v845 = vpop.permute.xlu0 %844
        %846 = vrot.lane.b32.xlu0 %v831, 64
        %v847 = vpop.permute.xlu0 %846
        %v856 = vunpack.c.l.b16 %v519
        %v857 = vunpack.c.l.b16 %v520
        %v858 = vunpack.c.l.b16 %v521
        %v859 = vunpack.c.l.b16 %v522
        %v860 = vunpack.c.l.b16 %v523
        %v861 = vunpack.c.l.b16 %v524
        %v862 = vunpack.c.l.b16 %v525
        %v863 = vunpack.c.l.b16 %v526
        %v864 = vpack.c.b16 %v760, %v856
        %v865 = vpack.c.b16 %v761, %v857
        %v866 = vpack.c.b16 %v762, %v858
        %v867 = vpack.c.b16 %v763, %v859
        %v868 = vpack.c.b16 %v764, %v860
        %v869 = vpack.c.b16 %v765, %v861
        %v870 = vpack.c.b16 %v766, %v862
        %v871 = vpack.c.b16 %v767, %v863
        %v872 = vrot.slane %v864, 1
        %v873 = vrot.slane %v865, 1
        %v874 = vrot.slane %v866, 1
        %v875 = vrot.slane %v867, 1
        %v876 = vrot.slane %v868, 1
        %v877 = vrot.slane %v869, 1
        %v878 = vrot.slane %v870, 1
        %v879 = vrot.slane %v871, 1
        %880 = vrot.lane.b32.xlu0 %v872, 112
        %v881 = vpop.permute.xlu0 %880
        %882 = vrot.lane.b32.xlu0 %v873, 112
        %v883 = vpop.permute.xlu0 %882
        %884 = vrot.lane.b32.xlu0 %v874, 112
        %v885 = vpop.permute.xlu0 %884
        %886 = vrot.lane.b32.xlu0 %v875, 112
        %v887 = vpop.permute.xlu0 %886
        %888 = vrot.lane.b32.xlu0 %v876, 112
        %v889 = vpop.permute.xlu0 %888
        %890 = vrot.lane.b32.xlu0 %v877, 112
        %v891 = vpop.permute.xlu0 %890
        %892 = vrot.lane.b32.xlu0 %v878, 112
        %v893 = vpop.permute.xlu0 %892
        %894 = vrot.lane.b32.xlu0 %v879, 112
        %v895 = vpop.permute.xlu0 %894
        %v904 = vunpack.c.l.b16 %v528
        %v905 = vunpack.c.l.b16 %v529
        %v906 = vunpack.c.l.b16 %v530
        %v907 = vunpack.c.l.b16 %v531
        %v908 = vunpack.c.l.b16 %v532
        %v909 = vunpack.c.l.b16 %v533
        %v910 = vunpack.c.l.b16 %v534
        %v911 = vunpack.c.l.b16 %v535
        %v912 = vpack.c.b16 %v904, %v904
        %v913 = vpack.c.b16 %v905, %v905
        %v914 = vpack.c.b16 %v906, %v906
        %v915 = vpack.c.b16 %v907, %v907
        %v916 = vpack.c.b16 %v908, %v908
        %v917 = vpack.c.b16 %v909, %v909
        %v918 = vpack.c.b16 %v910, %v910
        %v919 = vpack.c.b16 %v911, %v911
        %920 = vrot.lane.b32.xlu0 %v912, 32
        %v921 = vpop.permute.xlu0 %920
        %922 = vrot.lane.b32.xlu0 %v913, 32
        %v923 = vpop.permute.xlu0 %922
        %924 = vrot.lane.b32.xlu0 %v914, 32
        %v925 = vpop.permute.xlu0 %924
        %926 = vrot.lane.b32.xlu0 %v915, 32
        %v927 = vpop.permute.xlu0 %926
        %928 = vrot.lane.b32.xlu0 %v916, 32
        %v929 = vpop.permute.xlu0 %928
        %930 = vrot.lane.b32.xlu0 %v917, 32
        %v931 = vpop.permute.xlu0 %930
        %932 = vrot.lane.b32.xlu0 %v918, 32
        %v933 = vpop.permute.xlu0 %932
        %934 = vrot.lane.b32.xlu0 %v919, 32
        %v935 = vpop.permute.xlu0 %934
        %v944 = vunpack.c.l.b16 %v536
        %v945 = vunpack.c.l.b16 %v537
        %v946 = vunpack.c.l.b16 %v538
        %v947 = vunpack.c.l.b16 %v539
        %v948 = vunpack.c.l.b16 %v540
        %v949 = vunpack.c.l.b16 %v541
        %v950 = vunpack.c.l.b16 %v542
        %v951 = vunpack.c.l.b16 %v543
        %v952 = vpack.c.b16 %v944, %v904
        %v953 = vpack.c.b16 %v945, %v905
        %v954 = vpack.c.b16 %v946, %v906
        %v955 = vpack.c.b16 %v947, %v907
        %v956 = vpack.c.b16 %v948, %v908
        %v957 = vpack.c.b16 %v949, %v909
        %v958 = vpack.c.b16 %v950, %v910
        %v959 = vpack.c.b16 %v951, %v911
        %v961 = vshrl.u32 %v952, 16
        %v963 = vshll.u32 %v952, 16
        %v965 = vrot.slane %v963, 1
        %v966 = vor.u32 %v961, %v965
        %v968 = vshrl.u32 %v953, 16
        %v970 = vshll.u32 %v953, 16
        %v972 = vrot.slane %v970, 1
        %v973 = vor.u32 %v968, %v972
        %v975 = vshrl.u32 %v954, 16
        %v977 = vshll.u32 %v954, 16
        %v979 = vrot.slane %v977, 1
        %v980 = vor.u32 %v975, %v979
        %v982 = vshrl.u32 %v955, 16
        %v984 = vshll.u32 %v955, 16
        %v986 = vrot.slane %v984, 1
        %v987 = vor.u32 %v982, %v986
        %v989 = vshrl.u32 %v956, 16
        %v991 = vshll.u32 %v956, 16
        %v993 = vrot.slane %v991, 1
        %v994 = vor.u32 %v989, %v993
        %v996 = vshrl.u32 %v957, 16
        %v998 = vshll.u32 %v957, 16
        %v1000 = vrot.slane %v998, 1
        %v1001 = vor.u32 %v996, %v1000
        %v1003 = vshrl.u32 %v958, 16
        %v1005 = vshll.u32 %v958, 16
        %v1007 = vrot.slane %v1005, 1
        %v1008 = vor.u32 %v1003, %v1007
        %v1010 = vshrl.u32 %v959, 16
        %v1012 = vshll.u32 %v959, 16
        %v1014 = vrot.slane %v1012, 1
        %v1015 = vor.u32 %v1010, %v1014
        %1016 = vrot.lane.b32.xlu0 %v966, 80
        %v1017 = vpop.permute.xlu0 %1016
        %1018 = vrot.lane.b32.xlu0 %v973, 80
        %v1019 = vpop.permute.xlu0 %1018
        %1020 = vrot.lane.b32.xlu0 %v980, 80
        %v1021 = vpop.permute.xlu0 %1020
        %1022 = vrot.lane.b32.xlu0 %v987, 80
        %v1023 = vpop.permute.xlu0 %1022
        %1024 = vrot.lane.b32.xlu0 %v994, 80
        %v1025 = vpop.permute.xlu0 %1024
        %1026 = vrot.lane.b32.xlu0 %v1001, 80
        %v1027 = vpop.permute.xlu0 %1026
        %1028 = vrot.lane.b32.xlu0 %v1008, 80
        %v1029 = vpop.permute.xlu0 %1028
        %1030 = vrot.lane.b32.xlu0 %v1015, 80
        %v1031 = vpop.permute.xlu0 %1030
        %v1040 = vunpack.c.l.b16 %v544
        %v1041 = vunpack.c.l.b16 %v545
        %v1042 = vunpack.c.l.b16 %v546
        %v1043 = vunpack.c.l.b16 %v547
        %v1044 = vunpack.c.l.b16 %v548
        %v1045 = vunpack.c.l.b16 %v549
        %v1046 = vunpack.c.l.b16 %v550
        %v1047 = vunpack.c.l.b16 %v551
        %v1048 = vpack.c.b16 %v944, %v1040
        %v1049 = vpack.c.b16 %v945, %v1041
        %v1050 = vpack.c.b16 %v946, %v1042
        %v1051 = vpack.c.b16 %v947, %v1043
        %v1052 = vpack.c.b16 %v948, %v1044
        %v1053 = vpack.c.b16 %v949, %v1045
        %v1054 = vpack.c.b16 %v950, %v1046
        %v1055 = vpack.c.b16 %v951, %v1047
        %v1056 = vrot.slane %v1048, 1
        %v1057 = vrot.slane %v1049, 1
        %v1058 = vrot.slane %v1050, 1
        %v1059 = vrot.slane %v1051, 1
        %v1060 = vrot.slane %v1052, 1
        %v1061 = vrot.slane %v1053, 1
        %v1062 = vrot.slane %v1054, 1
        %v1063 = vrot.slane %v1055, 1
        %vm1064 = vcmask 392192
        %v1067 = vsel %vm1064, %v479, %v649
        %v1070 = vsel %vm1064, %v480, %v651
        %v1073 = vsel %vm1064, %v481, %v653
        %v1076 = vsel %vm1064, %v482, %v655
        %v1079 = vsel %vm1064, %v483, %v657
        %v1082 = vsel %vm1064, %v484, %v659
        %v1085 = vsel %vm1064, %v485, %v661
        %v1088 = vsel %vm1064, %v486, %v663
        %vm1089 = vcmask 785408
        %v1091 = vsel %vm1089, %v1067, %v697
        %v1093 = vsel %vm1089, %v1070, %v699
        %v1095 = vsel %vm1089, %v1073, %v701
        %v1097 = vsel %vm1089, %v1076, %v703
        %v1099 = vsel %vm1089, %v1079, %v705
        %v1101 = vsel %vm1089, %v1082, %v707
        %v1103 = vsel %vm1089, %v1085, %v709
        %v1105 = vsel %vm1089, %v1088, %v711
        %vm1106 = vcmask 130048
        %v1108 = vsel %vm1106, %v697, %v737
        %v1110 = vsel %vm1106, %v699, %v739
        %v1112 = vsel %vm1106, %v701, %v741
        %v1114 = vsel %vm1106, %v703, %v743
        %v1116 = vsel %vm1106, %v705, %v745
        %v1118 = vsel %vm1106, %v707, %v747
        %v1120 = vsel %vm1106, %v709, %v749
        %v1122 = vsel %vm1106, %v711, %v751
        %vm1123 = vcmask 523264
        %v1125 = vsel %vm1123, %v1108, %v833
        %v1127 = vsel %vm1123, %v1110, %v835
        %v1129 = vsel %vm1123, %v1112, %v837
        %v1131 = vsel %vm1123, %v1114, %v839
        %v1133 = vsel %vm1123, %v1116, %v841
        %v1135 = vsel %vm1123, %v1118, %v843
        %v1137 = vsel %vm1123, %v1120, %v845
        %v1139 = vsel %vm1123, %v1122, %v847
        %vm1140 = vcmask 916480
        %v1142 = vsel %vm1140, %v1125, %v881
        %v1144 = vsel %vm1140, %v1127, %v883
        %v1146 = vsel %vm1140, %v1129, %v885
        %v1148 = vsel %vm1140, %v1131, %v887
        %v1150 = vsel %vm1140, %v1133, %v889
        %v1152 = vsel %vm1140, %v1135, %v891
        %v1154 = vsel %vm1140, %v1137, %v893
        %v1156 = vsel %vm1140, %v1139, %v895
        %vm1157 = vcmask 261120
        %v1159 = vsel %vm1157, %v881, %v921
        %v1161 = vsel %vm1157, %v883, %v923
        %v1163 = vsel %vm1157, %v885, %v925
        %v1165 = vsel %vm1157, %v887, %v927
        %v1167 = vsel %vm1157, %v889, %v929
        %v1169 = vsel %vm1157, %v891, %v931
        %v1171 = vsel %vm1157, %v893, %v933
        %v1173 = vsel %vm1157, %v895, %v935
        %vm1174 = vcmask 654336
        %v1176 = vsel %vm1174, %v1159, %v1017
        %v1178 = vsel %vm1174, %v1161, %v1019
        %v1180 = vsel %vm1174, %v1163, %v1021
        %v1182 = vsel %vm1174, %v1165, %v1023
        %v1184 = vsel %vm1174, %v1167, %v1025
        %v1186 = vsel %vm1174, %v1169, %v1027
        %v1188 = vsel %vm1174, %v1171, %v1029
        %v1190 = vsel %vm1174, %v1173, %v1031
        %v1215 = vunpack.c.l.b16 %v1091
        %v1216 = vunpack.c.l.b16 %v1142
        %v1217 = vunpack.c.l.b16 %v1176
        %v1218 = vunpack.c.l.b16 %v1056
        %v1219 = vunpack.c.l.b16 %v1093
        %v1220 = vunpack.c.l.b16 %v1144
        %v1221 = vunpack.c.l.b16 %v1178
        %v1222 = vunpack.c.l.b16 %v1057
        %v1223 = vunpack.c.l.b16 %v1095
        %v1224 = vunpack.c.l.b16 %v1146
        %v1225 = vunpack.c.l.b16 %v1180
        %v1226 = vunpack.c.l.b16 %v1058
        %v1227 = vunpack.c.l.b16 %v1097
        %v1228 = vunpack.c.l.b16 %v1148
        %v1229 = vunpack.c.l.b16 %v1182
        %v1230 = vunpack.c.l.b16 %v1059
        %v1231 = vunpack.c.l.b16 %v1099
        %v1232 = vunpack.c.l.b16 %v1150
        %v1233 = vunpack.c.l.b16 %v1184
        %v1234 = vunpack.c.l.b16 %v1060
        %v1235 = vunpack.c.l.b16 %v1101
        %v1236 = vunpack.c.l.b16 %v1152
        %v1237 = vunpack.c.l.b16 %v1186
        %v1238 = vunpack.c.l.b16 %v1061
        %v1239 = vunpack.c.l.b16 %v1103
        %v1240 = vunpack.c.l.b16 %v1154
        %v1241 = vunpack.c.l.b16 %v1188
        %v1242 = vunpack.c.l.b16 %v1062
        %v1243 = vunpack.c.l.b16 %v1105
        %v1244 = vunpack.c.l.b16 %v1156
        %v1245 = vunpack.c.l.b16 %v1190
        %v1246 = vunpack.c.l.b16 %v1063
        %v1248 = vperm.slane %v335, 0
        %v1249 = vperm.slane %v335, 1
        %v1252 = vpack.c.b16 %v1219, %v1215
        %v1253 = vpack.c.b16 %v1220, %v1216
        %v1254 = vpack.c.b16 %v1221, %v1217
        %v1255 = vpack.c.b16 %v1222, %v1218
        %v1256 = vpack.c.b16 %v1227, %v1223
        %v1257 = vpack.c.b16 %v1228, %v1224
        %v1258 = vpack.c.b16 %v1229, %v1225
        %v1259 = vpack.c.b16 %v1230, %v1226
        %v1260 = vpack.c.b16 %v1235, %v1231
        %v1261 = vpack.c.b16 %v1236, %v1232
        %v1262 = vpack.c.b16 %v1237, %v1233
        %v1263 = vpack.c.b16 %v1238, %v1234
        %v1264 = vpack.c.b16 %v1243, %v1239
        %v1265 = vpack.c.b16 %v1244, %v1240
        %v1266 = vpack.c.b16 %v1245, %v1241
        %v1267 = vpack.c.b16 %v1246, %v1242
        %v1334 = vunpack.c.l.b16 %v281
        %v1335 = vunpack.c.h.b16 %v281
        %v1336 = vunpack.c.l.b16 %v282
        %v1337 = vunpack.c.h.b16 %v282
        %v1338 = vunpack.c.l.b16 %v283
        %v1339 = vunpack.c.h.b16 %v283
        %v1340 = vunpack.c.l.b16 %v284
        %v1341 = vunpack.c.h.b16 %v284
        %v1342 = vunpack.c.l.b16 %v285
        %v1343 = vunpack.c.h.b16 %v285
        %v1344 = vunpack.c.l.b16 %v286
        %v1345 = vunpack.c.h.b16 %v286
        %v1346 = vunpack.c.l.b16 %v287
        %v1347 = vunpack.c.h.b16 %v287
        %v1348 = vunpack.c.l.b16 %v288
        %v1349 = vunpack.c.h.b16 %v288
        %v1350 = vunpack.c.l.b16 %v289
        %v1351 = vunpack.c.h.b16 %v289
        %v1352 = vunpack.c.l.b16 %v290
        %v1353 = vunpack.c.h.b16 %v290
        %v1354 = vunpack.c.l.b16 %v291
        %v1355 = vunpack.c.h.b16 %v291
        %v1356 = vunpack.c.l.b16 %v292
        %v1357 = vunpack.c.h.b16 %v292
        %v1358 = vunpack.c.l.b16 %v293
        %v1359 = vunpack.c.h.b16 %v293
        %v1360 = vunpack.c.l.b16 %v294
        %v1361 = vunpack.c.h.b16 %v294
        %v1362 = vunpack.c.l.b16 %v295
        %v1363 = vunpack.c.h.b16 %v295
        %v1364 = vunpack.c.l.b16 %v296
        %v1365 = vunpack.c.h.b16 %v296
        %v1366 = vunpack.c.l.b16 %v297
        %v1367 = vunpack.c.h.b16 %v297
        %v1368 = vunpack.c.l.b16 %v298
        %v1369 = vunpack.c.h.b16 %v298
        %v1370 = vunpack.c.l.b16 %v299
        %v1371 = vunpack.c.h.b16 %v299
        %v1372 = vunpack.c.l.b16 %v300
        %v1373 = vunpack.c.h.b16 %v300
        %v1374 = vunpack.c.l.b16 %v301
        %v1375 = vunpack.c.h.b16 %v301
        %v1376 = vunpack.c.l.b16 %v302
        %v1377 = vunpack.c.h.b16 %v302
        %v1378 = vunpack.c.l.b16 %v303
        %v1379 = vunpack.c.h.b16 %v303
        %v1380 = vunpack.c.l.b16 %v304
        %v1381 = vunpack.c.h.b16 %v304
        %v1382 = vunpack.c.l.b16 %v305
        %v1383 = vunpack.c.h.b16 %v305
        %v1384 = vunpack.c.l.b16 %v306
        %v1385 = vunpack.c.h.b16 %v306
        %v1386 = vunpack.c.l.b16 %v307
        %v1387 = vunpack.c.h.b16 %v307
        %v1388 = vunpack.c.l.b16 %v308
        %v1389 = vunpack.c.h.b16 %v308
        %v1390 = vunpack.c.l.b16 %v309
        %v1391 = vunpack.c.h.b16 %v309
        %v1392 = vunpack.c.l.b16 %v310
        %v1393 = vunpack.c.h.b16 %v310
        %v1394 = vunpack.c.l.b16 %v311
        %v1395 = vunpack.c.h.b16 %v311
        %v1396 = vunpack.c.l.b16 %v312
        %v1397 = vunpack.c.h.b16 %v312
        %v1398 = vunpack.c.l.b16 %v313
        %v1399 = vunpack.c.h.b16 %v313
        %v1400 = vunpack.c.l.b16 %v314
        %v1401 = vunpack.c.h.b16 %v314
        %v1402 = vunpack.c.l.b16 %v315
        %v1403 = vunpack.c.h.b16 %v315
        %v1404 = vunpack.c.l.b16 %v316
        %v1405 = vunpack.c.h.b16 %v316
        %v1406 = vunpack.c.l.b16 %v317
        %v1407 = vunpack.c.h.b16 %v317
        %v1408 = vunpack.c.l.b16 %v318
        %v1409 = vunpack.c.h.b16 %v318
        %v1410 = vunpack.c.l.b16 %v319
        %v1411 = vunpack.c.h.b16 %v319
        %v1412 = vunpack.c.l.b16 %v320
        %v1413 = vunpack.c.h.b16 %v320
        %v1414 = vunpack.c.l.b16 %v321
        %v1415 = vunpack.c.h.b16 %v321
        %v1416 = vunpack.c.l.b16 %v322
        %v1417 = vunpack.c.h.b16 %v322
        %v1418 = vunpack.c.l.b16 %v323
        %v1419 = vunpack.c.h.b16 %v323
        %v1420 = vunpack.c.l.b16 %v324
        %v1421 = vunpack.c.h.b16 %v324
        %v1422 = vunpack.c.l.b16 %v325
        %v1423 = vunpack.c.h.b16 %v325
        %v1424 = vunpack.c.l.b16 %v326
        %v1425 = vunpack.c.h.b16 %v326
        %v1426 = vunpack.c.l.b16 %v327
        %v1427 = vunpack.c.h.b16 %v327
        %v1428 = vunpack.c.l.b16 %v328
        %v1429 = vunpack.c.h.b16 %v328
        %v1430 = vunpack.c.l.b16 %v329
        %v1431 = vunpack.c.h.b16 %v329
        %v1432 = vunpack.c.l.b16 %v330
        %v1433 = vunpack.c.h.b16 %v330
        %v1434 = vunpack.c.l.b16 %v331
        %v1435 = vunpack.c.h.b16 %v331
        %v1436 = vunpack.c.l.b16 %v332
        %v1437 = vunpack.c.h.b16 %v332
        %v1438 = vunpack.c.l.b16 %v333
        %v1439 = vunpack.c.h.b16 %v333
        %v1440 = vunpack.c.l.b16 %v334
        %v1441 = vunpack.c.h.b16 %v334
        %v1442 = vpack.c.b16 %v1336, %v1334
        %v1443 = vpack.c.b16 %v1337, %v1335
        %v1444 = vpack.c.b16 %v1340, %v1338
        %v1445 = vpack.c.b16 %v1341, %v1339
        %v1446 = vpack.c.b16 %v1344, %v1342
        %v1447 = vpack.c.b16 %v1345, %v1343
        %v1448 = vpack.c.b16 %v1348, %v1346
        %v1449 = vpack.c.b16 %v1349, %v1347
        %v1450 = vpack.c.b16 %v1352, %v1350
        %v1451 = vpack.c.b16 %v1353, %v1351
        %v1452 = vpack.c.b16 %v1356, %v1354
        %v1453 = vpack.c.b16 %v1357, %v1355
        %v1454 = vpack.c.b16 %v1360, %v1358
        %v1455 = vpack.c.b16 %v1361, %v1359
        %v1456 = vpack.c.b16 %v1364, %v1362
        %v1457 = vpack.c.b16 %v1365, %v1363
        %v1458 = vpack.c.b16 %v1368, %v1366
        %v1459 = vpack.c.b16 %v1369, %v1367
        %v1460 = vpack.c.b16 %v1372, %v1370
        %v1461 = vpack.c.b16 %v1373, %v1371
        %v1462 = vpack.c.b16 %v1376, %v1374
        %v1463 = vpack.c.b16 %v1377, %v1375
        %v1464 = vpack.c.b16 %v1380, %v1378
        %v1465 = vpack.c.b16 %v1381, %v1379
        %v1466 = vpack.c.b16 %v1384, %v1382
        %v1467 = vpack.c.b16 %v1385, %v1383
        %v1468 = vpack.c.b16 %v1388, %v1386
        %v1469 = vpack.c.b16 %v1389, %v1387
        %v1470 = vpack.c.b16 %v1392, %v1390
        %v1471 = vpack.c.b16 %v1393, %v1391
        %v1472 = vpack.c.b16 %v1396, %v1394
        %v1473 = vpack.c.b16 %v1397, %v1395
        %v1474 = vpack.c.b16 %v1400, %v1398
        %v1475 = vpack.c.b16 %v1401, %v1399
        %v1476 = vpack.c.b16 %v1404, %v1402
        %v1477 = vpack.c.b16 %v1405, %v1403
        %v1478 = vpack.c.b16 %v1408, %v1406
        %v1479 = vpack.c.b16 %v1409, %v1407
        %v1480 = vpack.c.b16 %v1412, %v1410
        %v1481 = vpack.c.b16 %v1413, %v1411
        %v1482 = vpack.c.b16 %v1416, %v1414
        %v1483 = vpack.c.b16 %v1417, %v1415
        %v1484 = vpack.c.b16 %v1420, %v1418
        %v1485 = vpack.c.b16 %v1421, %v1419
        %v1486 = vpack.c.b16 %v1424, %v1422
        %v1487 = vpack.c.b16 %v1425, %v1423
        %v1488 = vpack.c.b16 %v1428, %v1426
        %v1489 = vpack.c.b16 %v1429, %v1427
        %v1490 = vpack.c.b16 %v1432, %v1430
        %v1491 = vpack.c.b16 %v1433, %v1431
        %v1492 = vpack.c.b16 %v1436, %v1434
        %v1493 = vpack.c.b16 %v1437, %v1435
        %v1494 = vpack.c.b16 %v1440, %v1438
        %v1495 = vpack.c.b16 %v1441, %v1439
        %v1551 = vsel %vm1064, %v1255, 0
        %v1554 = vsel %vm1064, %v1259, 0
        %v1557 = vsel %vm1064, %v1263, 0
        %v1560 = vsel %vm1064, %v1267, 0
        %1562 = vmatpush.bf16.msra.mxu0 %v1456
        %1563 = vmatpush.bf16.msra.mxu0 %v1454
        %1564 = vmatpush.bf16.msra.mxu0 %v1452
        %1565 = vmatpush.bf16.msra.mxu0 %v1450
        %1566 = vmatpush.bf16.msra.mxu0 %v1448
        %1567 = vmatpush.bf16.msra.mxu0 %v1446
        %1568 = vmatpush.bf16.msra.mxu0 %v1444
        %1569 = vmatpush.bf16.msra.mxu0 %v1442
        %1570 = vmatmul.bf16.gmra.mxu0 %v1252
        %v1571 = vpop.f32.mrf.mxu0
        %v1572 = vadd.f32 %v1248, %v1571
        %v1573 = vpop.f32.mrf.mxu0
        %v1574 = vadd.f32 %v1248, %v1573
        %1575 = vmatmul.bf16.gmra.mxu0 %v1256
        %v1576 = vpop.f32.mrf.mxu0
        %v1577 = vadd.f32 %v1248, %v1576
        %v1578 = vpop.f32.mrf.mxu0
        %v1579 = vadd.f32 %v1248, %v1578
        %1580 = vmatmul.bf16.gmra.mxu0 %v1260
        %v1581 = vpop.f32.mrf.mxu0
        %v1582 = vadd.f32 %v1248, %v1581
        %v1583 = vpop.f32.mrf.mxu0
        %v1584 = vadd.f32 %v1248, %v1583
        %1585 = vmatmul.bf16.gmra.mxu0 %v1264
        %v1586 = vpop.f32.mrf.mxu0
        %v1587 = vadd.f32 %v1248, %v1586
        %v1588 = vpop.f32.mrf.mxu0
        %v1589 = vadd.f32 %v1248, %v1588
        %1590 = vdwg.mxu0
        %1591 = vmatpush.bf16.msra.mxu0 %v1472
        %1592 = vmatpush.bf16.msra.mxu0 %v1470
        %1593 = vmatpush.bf16.msra.mxu0 %v1468
        %1594 = vmatpush.bf16.msra.mxu0 %v1466
        %1595 = vmatpush.bf16.msra.mxu0 %v1464
        %1596 = vmatpush.bf16.msra.mxu0 %v1462
        %1597 = vmatpush.bf16.msra.mxu0 %v1460
        %1598 = vmatpush.bf16.msra.mxu0 %v1458
        %1599 = vmatmul.bf16.gmra.mxu0 %v1253
        %v1600 = vpop.f32.mrf.mxu0
        %v1601 = vadd.f32 %v1572, %v1600
        %v1602 = vpop.f32.mrf.mxu0
        %v1603 = vadd.f32 %v1574, %v1602
        %1604 = vmatmul.bf16.gmra.mxu0 %v1257
        %v1605 = vpop.f32.mrf.mxu0
        %v1606 = vadd.f32 %v1577, %v1605
        %v1607 = vpop.f32.mrf.mxu0
        %v1608 = vadd.f32 %v1579, %v1607
        %1609 = vmatmul.bf16.gmra.mxu0 %v1261
        %v1610 = vpop.f32.mrf.mxu0
        %v1611 = vadd.f32 %v1582, %v1610
        %v1612 = vpop.f32.mrf.mxu0
        %v1613 = vadd.f32 %v1584, %v1612
        %1614 = vmatmul.bf16.gmra.mxu0 %v1265
        %v1615 = vpop.f32.mrf.mxu0
        %v1616 = vadd.f32 %v1587, %v1615
        %v1617 = vpop.f32.mrf.mxu0
        %v1618 = vadd.f32 %v1589, %v1617
        %1619 = vdwg.mxu0
        %1620 = vmatpush.bf16.msra.mxu0 %v1488
        %1621 = vmatpush.bf16.msra.mxu0 %v1486
        %1622 = vmatpush.bf16.msra.mxu0 %v1484
        %1623 = vmatpush.bf16.msra.mxu0 %v1482
        %1624 = vmatpush.bf16.msra.mxu0 %v1480
        %1625 = vmatpush.bf16.msra.mxu0 %v1478
        %1626 = vmatpush.bf16.msra.mxu0 %v1476
        %1627 = vmatpush.bf16.msra.mxu0 %v1474
        %1628 = vmatmul.bf16.gmra.mxu0 %v1254
        %v1629 = vpop.f32.mrf.mxu0
        %v1630 = vadd.f32 %v1601, %v1629
        %v1631 = vpop.f32.mrf.mxu0
        %v1632 = vadd.f32 %v1603, %v1631
        %1633 = vmatmul.bf16.gmra.mxu0 %v1258
        %v1634 = vpop.f32.mrf.mxu0
        %v1635 = vadd.f32 %v1606, %v1634
        %v1636 = vpop.f32.mrf.mxu0
        %v1637 = vadd.f32 %v1608, %v1636
        %1638 = vmatmul.bf16.gmra.mxu0 %v1262
        %v1639 = vpop.f32.mrf.mxu0
        %v1640 = vadd.f32 %v1611, %v1639
        %v1641 = vpop.f32.mrf.mxu0
        %v1642 = vadd.f32 %v1613, %v1641
        %1643 = vmatmul.bf16.gmra.mxu0 %v1266
        %v1644 = vpop.f32.mrf.mxu0
        %v1645 = vadd.f32 %v1616, %v1644
        %v1646 = vpop.f32.mrf.mxu0
        %v1647 = vadd.f32 %v1618, %v1646
        %1648 = vdwg.mxu0
        %1649 = vmatpush.bf16.msra.mxu0 0
        %1650 = vmatpush.bf16.msra.mxu0 0
        %1651 = vmatpush.bf16.msra.mxu0 0
        %1652 = vmatpush.bf16.msra.mxu0 0
        %1653 = vmatpush.bf16.msra.mxu0 0
        %1654 = vmatpush.bf16.msra.mxu0 %v1494
        %1655 = vmatpush.bf16.msra.mxu0 %v1492
        %1656 = vmatpush.bf16.msra.mxu0 %v1490
        %1657 = vmatmul.bf16.gmra.mxu0 %v1551
        %v1658 = vpop.f32.mrf.mxu0
        %v1659 = vadd.f32 %v1630, %v1658
        %v1660 = vpop.f32.mrf.mxu0
        %v1661 = vadd.f32 %v1632, %v1660
        %1662 = vmatmul.bf16.gmra.mxu0 %v1554
        %v1663 = vpop.f32.mrf.mxu0
        %v1664 = vadd.f32 %v1635, %v1663
        %v1665 = vpop.f32.mrf.mxu0
        %v1666 = vadd.f32 %v1637, %v1665
        %1667 = vmatmul.bf16.gmra.mxu0 %v1557
        %v1668 = vpop.f32.mrf.mxu0
        %v1669 = vadd.f32 %v1640, %v1668
        %v1670 = vpop.f32.mrf.mxu0
        %v1671 = vadd.f32 %v1642, %v1670
        %1672 = vmatmul.bf16.gmra.mxu0 %v1560
        %v1673 = vpop.f32.mrf.mxu0
        %v1674 = vadd.f32 %v1645, %v1673
        %v1675 = vpop.f32.mrf.mxu0
        %v1676 = vadd.f32 %v1647, %v1675
        %1677 = vdwg.mxu0
        %1678 = vmatpush.bf16.msra.mxu0 %v1457
        %1679 = vmatpush.bf16.msra.mxu0 %v1455
        %1680 = vmatpush.bf16.msra.mxu0 %v1453
        %1681 = vmatpush.bf16.msra.mxu0 %v1451
        %1682 = vmatpush.bf16.msra.mxu0 %v1449
        %1683 = vmatpush.bf16.msra.mxu0 %v1447
        %1684 = vmatpush.bf16.msra.mxu0 %v1445
        %1685 = vmatpush.bf16.msra.mxu0 %v1443
        %1686 = vmatmul.bf16.gmra.mxu0 %v1252
        %v1687 = vpop.f32.mrf.mxu0
        %v1688 = vadd.f32 %v1249, %v1687
        %v1689 = vpop.f32.mrf.mxu0
        %v1690 = vadd.f32 %v1249, %v1689
        %1691 = vmatmul.bf16.gmra.mxu0 %v1256
        %v1692 = vpop.f32.mrf.mxu0
        %v1693 = vadd.f32 %v1249, %v1692
        %v1694 = vpop.f32.mrf.mxu0
        %v1695 = vadd.f32 %v1249, %v1694
        %1696 = vmatmul.bf16.gmra.mxu0 %v1260
        %v1697 = vpop.f32.mrf.mxu0
        %v1698 = vadd.f32 %v1249, %v1697
        %v1699 = vpop.f32.mrf.mxu0
        %v1700 = vadd.f32 %v1249, %v1699
        %1701 = vmatmul.bf16.gmra.mxu0 %v1264
        %v1702 = vpop.f32.mrf.mxu0
        %v1703 = vadd.f32 %v1249, %v1702
        %v1704 = vpop.f32.mrf.mxu0
        %v1705 = vadd.f32 %v1249, %v1704
        %1706 = vdwg.mxu0
        %1707 = vmatpush.bf16.msra.mxu0 %v1473
        %1708 = vmatpush.bf16.msra.mxu0 %v1471
        %1709 = vmatpush.bf16.msra.mxu0 %v1469
        %1710 = vmatpush.bf16.msra.mxu0 %v1467
        %1711 = vmatpush.bf16.msra.mxu0 %v1465
        %1712 = vmatpush.bf16.msra.mxu0 %v1463
        %1713 = vmatpush.bf16.msra.mxu0 %v1461
        %1714 = vmatpush.bf16.msra.mxu0 %v1459
        %1715 = vmatmul.bf16.gmra.mxu0 %v1253
        %v1716 = vpop.f32.mrf.mxu0
        %v1717 = vadd.f32 %v1688, %v1716
        %v1718 = vpop.f32.mrf.mxu0
        %v1719 = vadd.f32 %v1690, %v1718
        %1720 = vmatmul.bf16.gmra.mxu0 %v1257
        %v1721 = vpop.f32.mrf.mxu0
        %v1722 = vadd.f32 %v1693, %v1721
        %v1723 = vpop.f32.mrf.mxu0
        %v1724 = vadd.f32 %v1695, %v1723
        %1725 = vmatmul.bf16.gmra.mxu0 %v1261
        %v1726 = vpop.f32.mrf.mxu0
        %v1727 = vadd.f32 %v1698, %v1726
        %v1728 = vpop.f32.mrf.mxu0
        %v1729 = vadd.f32 %v1700, %v1728
        %1730 = vmatmul.bf16.gmra.mxu0 %v1265
        %v1731 = vpop.f32.mrf.mxu0
        %v1732 = vadd.f32 %v1703, %v1731
        %v1733 = vpop.f32.mrf.mxu0
        %v1734 = vadd.f32 %v1705, %v1733
        %1735 = vdwg.mxu0
        %1736 = vmatpush.bf16.msra.mxu0 %v1489
        %1737 = vmatpush.bf16.msra.mxu0 %v1487
        %1738 = vmatpush.bf16.msra.mxu0 %v1485
        %1739 = vmatpush.bf16.msra.mxu0 %v1483
        %1740 = vmatpush.bf16.msra.mxu0 %v1481
        %1741 = vmatpush.bf16.msra.mxu0 %v1479
        %1742 = vmatpush.bf16.msra.mxu0 %v1477
        %1743 = vmatpush.bf16.msra.mxu0 %v1475
        %1744 = vmatmul.bf16.gmra.mxu0 %v1254
        %v1745 = vpop.f32.mrf.mxu0
        %v1746 = vadd.f32 %v1717, %v1745
        %v1747 = vpop.f32.mrf.mxu0
        %v1748 = vadd.f32 %v1719, %v1747
        %1749 = vmatmul.bf16.gmra.mxu0 %v1258
        %v1750 = vpop.f32.mrf.mxu0
        %v1751 = vadd.f32 %v1722, %v1750
        %v1752 = vpop.f32.mrf.mxu0
        %v1753 = vadd.f32 %v1724, %v1752
        %1754 = vmatmul.bf16.gmra.mxu0 %v1262
        %v1755 = vpop.f32.mrf.mxu0
        %v1756 = vadd.f32 %v1727, %v1755
        %v1757 = vpop.f32.mrf.mxu0
        %v1758 = vadd.f32 %v1729, %v1757
        %1759 = vmatmul.bf16.gmra.mxu0 %v1266
        %v1760 = vpop.f32.mrf.mxu0
        %v1761 = vadd.f32 %v1732, %v1760
        %v1762 = vpop.f32.mrf.mxu0
        %v1763 = vadd.f32 %v1734, %v1762
        %1764 = vdwg.mxu0
        %1765 = vmatpush.bf16.msra.mxu0 0
        %1766 = vmatpush.bf16.msra.mxu0 0
        %1767 = vmatpush.bf16.msra.mxu0 0
        %1768 = vmatpush.bf16.msra.mxu0 0
        %1769 = vmatpush.bf16.msra.mxu0 0
        %1770 = vmatpush.bf16.msra.mxu0 %v1495
        %1771 = vmatpush.bf16.msra.mxu0 %v1493
        %1772 = vmatpush.bf16.msra.mxu0 %v1491
        %1773 = vmatmul.bf16.gmra.mxu0 %v1551
        %v1774 = vpop.f32.mrf.mxu0
        %v1775 = vadd.f32 %v1746, %v1774
        %v1776 = vpop.f32.mrf.mxu0
        %v1777 = vadd.f32 %v1748, %v1776
        %1778 = vmatmul.bf16.gmra.mxu0 %v1554
        %v1779 = vpop.f32.mrf.mxu0
        %v1780 = vadd.f32 %v1751, %v1779
        %v1781 = vpop.f32.mrf.mxu0
        %v1782 = vadd.f32 %v1753, %v1781
        %1783 = vmatmul.bf16.gmra.mxu0 %v1557
        %v1784 = vpop.f32.mrf.mxu0
        %v1785 = vadd.f32 %v1756, %v1784
        %v1786 = vpop.f32.mrf.mxu0
        %v1787 = vadd.f32 %v1758, %v1786
        %1788 = vmatmul.bf16.gmra.mxu0 %v1560
        %v1789 = vpop.f32.mrf.mxu0
        %v1790 = vadd.f32 %v1761, %v1789
        %v1791 = vpop.f32.mrf.mxu0
        %v1792 = vadd.f32 %v1763, %v1791
        %1793 = vdwg.mxu0
        %v1794 = vpack.c.bf16 %v1775, %v1659
        %v1795 = vpack.c.bf16 %v1777, %v1661
        %v1796 = vpack.c.bf16 %v1780, %v1664
        %v1797 = vpack.c.bf16 %v1782, %v1666
        %v1798 = vpack.c.bf16 %v1785, %v1669
        %v1799 = vpack.c.bf16 %v1787, %v1671
        %v1800 = vpack.c.bf16 %v1790, %v1674
        %v1801 = vpack.c.bf16 %v1792, %v1676
        %1802 = vst [vmem:[%s221] sm:$0xff] %v1794
        %1803 = vst [vmem:[%s221 + $0x8] sm:$0xff] %v1795
        %1804 = vst [vmem:[%s221 + $0x10] sm:$0xff] %v1796
        %1805 = vst [vmem:[%s221 + $0x18] sm:$0xff] %v1797
        %1806 = vst [vmem:[%s221 + $0x20] sm:$0xff] %v1798
        %1807 = vst [vmem:[%s221 + $0x28] sm:$0xff] %v1799
        %1808 = vst [vmem:[%s221 + $0x30] sm:$0xff] %v1800
        %1809 = vst [vmem:[%s221 + $0x38] sm:$0xff] %v1801
        %s1810 = sand.u32 %s97, 1
        %s1811 = scalar_lea.sflag [#allocation5], %s1810
        %s1812 = sand.u32 %s97, 1
        %s1813 = smul.addr %s1812, 64
        %s1814 = scalar_lea.vmem [#allocation9], %s1813
        // Predicated region
        $region49: #{tpu_custom_call.1} parent=31 // pred_check
          %p1815 = pneg %p107
        $region50: #{tpu_custom_call.1} parent=31 // pred_check_branch
          %1817 = sbr.rel (%p1815) target = $region52
        $region51: #{tpu_custom_call.1} parent=31 // pred_region
          %1819 = vsyncadd %s1811, 0
          %s1820 = smul.addr %s21, 16
          %s1821 = smul.addr %s1820, 4
          %s1822 = scalar_lea.hbm %s3, %s1821
          %s1823 = sshll.u32 %s1814, 4
          %s1824 = int_to_ptr.vmem [resolvable:$true] %s1823
          %s1825 = sshll.u32 %s1822, 4
          %s1826 = int_to_ptr.hbm [resolvable:$true] %s1825
          %1831 = dma.vmem_to_hbm [thread:$0]  %s1824, 1024, %s1826, %s1811, 128, 128, 8
        $region52: #{tpu_custom_call.1} parent=31 // pred_fallthru
          _
      $region32: #{tpu_custom_call.1} parent=5 // pred_fallthru
        _
      %p1832 = scmp.le.s32.totalorder 2, %s16
      // Predicated region
      $region53: #{tpu_custom_call.1} parent=5 // pred_check
        %p1833 = pneg %p1832
      $region54: #{tpu_custom_call.1} parent=5 // pred_check_branch
        %1835 = sbr.rel (%p1833) target = $region56
      $region55: #{tpu_custom_call.1} parent=5 // pred_region
        %s1836 = ssub.s32 %s16, 2
        // Predicated region
        $region57: #{tpu_custom_call.1} parent=55 // pred_check
          %p1837 = pneg %p113
        $region58: #{tpu_custom_call.1} parent=55 // pred_check_branch
          %1839 = sbr.rel (%p1837) target = $region60
        $region59: #{tpu_custom_call.1} parent=55 // pred_region
          %s1840 = sand.u32 %s98, 1
          %s1841 = scalar_lea.sflag [#allocation5], %s1840
          %s1842 = sand.u32 %s98, 1
          %s1843 = smul.addr %s1842, 64
          %s1844 = scalar_lea.vmem [#allocation9], %s1843
          %1846 = dma.done %s1841, 1024
        $region60: #{tpu_custom_call.1} parent=55 // pred_fallthru
          _
      $region56: #{tpu_custom_call.1} parent=5 // pred_fallthru
        _
    $region6: #{tpu_custom_call.1} parent=1 // loop_footer
      %s20 = sadd.s32 1, %s16
    $region7: #{tpu_custom_call.1} parent=1 // loop_footer_branch
      %15 = sbr.rel target = $region3
    $region8: #{tpu_custom_call.1} parent=1 // loop_exit
      _
    %1847 = vsyncpa [#allocation4], 1
    %s1848 = scalar_lea.sflag [#allocation4], 1
    %1849 = vsyncpa %s1848, 1
    %1850 = vsyncpa [#allocation7], 1
    %1851 = vsyncpa [#allocation5], 1
    %s1852 = scalar_lea.sflag [#allocation5], 1
    %1853 = vsyncpa %s1852, 1

</llo_original>
